<compile_context>
chip_gen: v7x
topology: tpu7x:2x2x1
jax: 0.10.0
libtpu: 0.0.40
codegen_flags: <defaults>
</compile_context>

<pallas_src>
import functools

import numpy as np
import jax
import jax.numpy as jnp
from jax.experimental import pallas as pl
from jax.experimental.pallas import tpu as pltpu


def _round_up(x, m):
    return ((x + m - 1) // m) * m


# ----------------------------------------------------------------------------
# Pallas kernel: fused 3-field embedding gather via one-hot + MXU matmul
# ----------------------------------------------------------------------------
def _cp_gather_kernel(pd_idx_ref, b_idx_ref, table_ref, pd_out_ref, b_out_ref):
    # pd_idx_ref: (1, TILE_PD, 1) int32  -- [pitch|dur] tokens, combined-vocab ids
    # b_idx_ref : (1, TILE_B, 1)  int32  -- beat tokens, combined-vocab ids
    # table_ref : (V_PAD, E) f32         -- (pitch|beat|dur) table, VMEM resident
    # pd_out_ref: (1, TILE_PD, E) f32    -- block of torch.cat((pe, de), dim=1)
    # b_out_ref : (1, TILE_B, E)  f32    -- block of be
    table = table_ref[...]
    v_pad = table.shape[0]

    def onehot_gather(idx_col):
        # idx_col: (n_tok, 1) int32.  One-hot built on the VPU (~2 ops/elem,
        # lane-broadcast of idx + lane iota), row gather done on the MXU.
        # HIGHEST keeps the f32 table rows exact because weights are 0/1.
        n_tok = idx_col.shape[0]
        iota = jax.lax.broadcasted_iota(jnp.int32, (n_tok, v_pad), 1)
        onehot = (idx_col == iota).astype(table.dtype)
        return jnp.dot(onehot, table,
                       precision=jax.lax.Precision.HIGHEST,
                       preferred_element_type=jnp.float32)

    pd_out_ref[0] = onehot_gather(pd_idx_ref[0]).astype(pd_out_ref.dtype)
    b_out_ref[0] = onehot_gather(b_idx_ref[0]).astype(b_out_ref.dtype)


def fused_cp_embedding(pd_idx, b_idx, table, seq_tile):
    """One pallas_call for all three embedding fields.

    pd_idx: (bsz, 2*seq, 1) int32 (combined-vocab ids, [pitch|dur] per batch)
    b_idx : (bsz, seq, 1)   int32 (combined-vocab ids, beat)
    table : (V_pad, E) f32
    Returns ((bsz, 2*seq, E), (bsz, seq, E)) f32 — already the final layouts.
    """
    bsz, two_seq, _ = pd_idx.shape
    seq = b_idx.shape[1]
    v_pad, e = table.shape
    tile_b = seq_tile
    tile_pd = 2 * seq_tile
    grid = (bsz, seq // seq_tile)

    # TODO(synk): the (tile, 1) index blocks get lane-padded to 128 in VMEM; a
    # lane-dense (1, tile) index layout + transposed one-hot would save ~0.5 MiB
    # per buffer at large tiles.
    return pl.pallas_call(
        _cp_gather_kernel,
        out_shape=(
            jax.ShapeDtypeStruct((bsz, two_seq, e), table.dtype),
            jax.ShapeDtypeStruct((bsz, seq, e), table.dtype),
        ),
        grid_spec=pltpu.PrefetchScalarGridSpec(
            num_scalar_prefetch=0,
            grid=grid,
            in_specs=[
                pl.BlockSpec((1, tile_pd, 1), lambda bi, si: (bi, si, 0)),
                pl.BlockSpec((1, tile_b, 1), lambda bi, si: (bi, si, 0)),
                pl.BlockSpec((v_pad, e), lambda bi, si: (0, 0)),   # tiny table, resident
            ],
            out_specs=[
                pl.BlockSpec((1, tile_pd, e), lambda bi, si: (bi, si, 0)),
                pl.BlockSpec((1, tile_b, e), lambda bi, si: (bi, si, 0)),
            ],
        ),
        compiler_params=pltpu.CompilerParams(
            dimension_semantics=("parallel", "parallel"),
        ),
    )(pd_idx, b_idx, table)


def _pick_seq_tile(seq, bsz, target=1024):
    """Beat-stream tokens per grid step (the pitch|dur stream gets 2x that)."""
    if seq % 8 != 0:
        return seq                      # ragged seq: one full-seq block (always legal)
    limit = min(seq, target)
    if bsz == 1:
        # v7x has 2 TensorCores: prefer >= 2 grid steps when batch alone gives 1.
        limit = min(limit, max(8, seq // 2))
    limit -= limit % 8
    for cand in range(limit, 7, -8):
        if seq % cand == 0:
            return cand
    return seq


# ----------------------------------------------------------------------------
# Plain-JAX glue
# ----------------------------------------------------------------------------
def build_raw2idx_table(idx2raw, table_size):
    # Duplicate raw values resolve last-wins, matching {raw: i} dict construction.
    tbl = np.zeros((table_size,), dtype=np.int32)
    for i, raw in enumerate(idx2raw):
        tbl[int(raw)] = i
    return jnp.asarray(tbl)


def map_raw_to_idx(raw, tbl):
    raw = raw.astype(jnp.int32)
    size = tbl.shape[0]
    in_range = (raw >= 0) & (raw < size)
    looked_up = jnp.take(tbl, jnp.clip(raw, 0, size - 1))
    return jnp.where(in_range, looked_up, 0)  # dict .get(val, 0) semantics


def build_combined_table(params, min_v_pad=128):
    """(pitch | beat | dur) rows, zero-padded so the MXU contraction dim is a
    multiple of 128.  Built ONCE at parameter-setup time, not per forward."""
    combined = jnp.concatenate(
        [params["pitch_embedding"], params["beat_embedding"], params["dur_embedding"]],
        axis=0)
    v_used = combined.shape[0]
    v_pad = max(min_v_pad, _round_up(v_used, 128))
    return jnp.pad(combined, ((0, v_pad - v_used), (0, 0)))


# ----------------------------------------------------------------------------
# CPEmbeddingLayer forward
# ----------------------------------------------------------------------------
@functools.partial(jax.jit, static_argnames=("pitch_num", "beat_num"))
def cp_embedding_forward(combined_table, raw2idx, x, beat_info, *, pitch_num, beat_num):
    # convert(): raw values -> per-field vocab indices (dict .get(val, 0) semantics)
    p = map_raw_to_idx(x[..., 2], raw2idx["pitch"])
    b = map_raw_to_idx(beat_info, raw2idx["beat"])
    d = map_raw_to_idx(x[..., 3], raw2idx["dur"])

    bsz, seq = p.shape
    seq_tile = _pick_seq_tile(seq, bsz)

    # Fused index streams already in the FINAL output order, with per-field row
    # offsets into the combined table:
    #   pd stream per batch = [pitch(seq) | dur(seq)]  -> torch.cat((pe, de), dim=1)
    #   beat stream                                    -> be
    pd_idx = jnp.concatenate(
        [p, d + (pitch_num + beat_num)], axis=1)[..., None].astype(jnp.int32)
    b_off = (b + pitch_num)[..., None].astype(jnp.int32)

    cat_out, be = fused_cp_embedding(pd_idx, b_off, combined_table, seq_tile)
    return cat_out, be, [b, p, d]


# ----------------------------------------------------------------------------
# Main
# ----------------------------------------------------------------------------
if __name__ == "__main__":
    key = jax.random.PRNGKey(0)
    k_pitch, k_beat, k_dur, k_x1, k_x2, k_beatinfo = jax.random.split(key, 6)

    # Synthetic vocab (raw values -> indices), mirroring vocab['idx2*'] lists.
    idx2pitch = [0, 60, 62, 64, 65, 67, 69, 71]   # pitch_num = 8
    idx2beat = [0, 1, 2, 3]                       # beat_num  = 4
    idx2dur = [0, 1, 2, 4, 8]                     # dur_num   = 5
    emb_size = 128                                # module default; lane-dense output

    raw2idx = {
        "pitch": build_raw2idx_table(idx2pitch, 128),
        "beat": build_raw2idx_table(idx2beat, 16),
        "dur": build_raw2idx_table(idx2dur, 16),
    }

    # Deterministic embedding weights (nn.Embedding ~ N(0,1) init).
    params = {
        "pitch_embedding": jax.random.normal(k_pitch, (len(idx2pitch), emb_size), jnp.float32),
        "beat_embedding": jax.random.normal(k_beat, (len(idx2beat), emb_size), jnp.float32),
        "dur_embedding": jax.random.normal(k_dur, (len(idx2dur), emb_size), jnp.float32),
    }
    combined_table = build_combined_table(params)   # hoisted out of the per-call forward

    # Inputs: x (batch, seq, 4) with raw pitch at [...,2], raw dur at [...,3].
    batch, seq = 2, 8
    pitch_raw = jnp.asarray(idx2pitch, jnp.int32)[
        jax.random.randint(k_x1, (batch, seq), 0, len(idx2pitch))
    ]
    dur_raw = jnp.asarray(idx2dur, jnp.int32)[
        jax.random.randint(k_x2, (batch, seq), 0, len(idx2dur))
    ]
    x = jnp.zeros((batch, seq, 4), jnp.int32)
    x = x.at[..., 2].set(pitch_raw).at[..., 3].set(dur_raw)
    beat_info = jnp.asarray(idx2beat, jnp.int32)[
        jax.random.randint(k_beatinfo, (batch, seq), 0, len(idx2beat))
    ]

    cat_out, be, (b_idx, p_idx, d_idx) = cp_embedding_forward(
        combined_table, raw2idx, x, beat_info,
        pitch_num=len(idx2pitch), beat_num=len(idx2beat))
    jax.block_until_ready(cat_out)
    jax.block_until_ready(be)

    # Pure-JAX reference (jnp.take gather); one-hot MXU gather @ HIGHEST is exact.
    pe_ref = jnp.take(params["pitch_embedding"], p_idx, axis=0)
    de_ref = jnp.take(params["dur_embedding"], d_idx, axis=0)
    be_ref = jnp.take(params["beat_embedding"], b_idx, axis=0)
    cat_ref = jnp.concatenate((pe_ref, de_ref), axis=1)

    assert cat_out.shape == (batch, 2 * seq, emb_size)
    assert be.shape == (batch, seq, emb_size)
    np.testing.assert_allclose(np.asarray(cat_out), np.asarray(cat_ref), atol=1e-5, rtol=1e-5)
    np.testing.assert_allclose(np.asarray(be), np.asarray(be_ref), atol=1e-5, rtol=1e-5)

    print("KERNEL_OK")
</pallas_src>

<mosaic_0001>
module attributes {stable_mosaic.version = 11 : i64} {
  func.func @_cp_gather_kernel(%arg0: i32, %arg1: i32, %arg2: memref<1x16x1xi32, #tpu.memory_space<vmem>>, %arg3: memref<1x8x1xi32, #tpu.memory_space<vmem>>, %arg4: memref<128x128xf32, #tpu.memory_space<vmem>>, %arg5: memref<1x16x128xf32, #tpu.memory_space<vmem>>, %arg6: memref<1x8x128xf32, #tpu.memory_space<vmem>>) attributes {dimension_semantics = [#tpu.dimension_semantics<parallel>, #tpu.dimension_semantics<parallel>], iteration_bounds = array<i64: 2, 1>, scalar_prefetch = 0 : i64, scratch_operands = 0 : i64, tpu.core_type = #tpu.core_type<tc>, window_params = [{transform_indices = @transform_0, window_bounds = array<i64: 1, 16, 1>}, {transform_indices = @transform_1, window_bounds = array<i64: 1, 8, 1>}, {pipeline_mode = #tpu.pipeline_mode<synchronous>, transform_indices = @transform_2, window_bounds = array<i64: 128, 128>}, {transform_indices = @transform_3, window_bounds = array<i64: 1, 16, 128>}, {transform_indices = @transform_4, window_bounds = array<i64: 1, 8, 128>}]} {
    %c0 = arith.constant 0 : index
    %c0_0 = arith.constant 0 : index
    %0 = vector.load %arg4[%c0, %c0_0] : memref<128x128xf32, #tpu.memory_space<vmem>>, vector<128x128xf32>
    %c0_1 = arith.constant 0 : index
    %c0_2 = arith.constant 0 : index
    %c0_3 = arith.constant 0 : index
    %1 = vector.load %arg2[%c0_1, %c0_2, %c0_3] : memref<1x16x1xi32, #tpu.memory_space<vmem>>, vector<1x16x1xi32>
    %2 = vector.shape_cast %1 : vector<1x16x1xi32> to vector<16x1xi32>
    %3 = tpu.iota {dimensions = array<i32: 1>} : vector<16x128xi32>
    %4 = vector.broadcast %2 : vector<16x1xi32> to vector<16x128xi32>
    %5 = arith.cmpi eq, %4, %3 : vector<16x128xi32>
    %6 = arith.extui %5 : vector<16x128xi1> to vector<16x128xi32>
    %7 = arith.sitofp %6 : vector<16x128xi32> to vector<16x128xf32>
    %cst = arith.constant dense<0.000000e+00> : vector<16x128xf32>
    %8 = tpu.matmul %7, %0, %cst {dimension_numbers = #tpu.dot_dimension_numbers<[1], [0], [0], [1], [0, 0, 1, 1], [], []>, precision = #tpu.contract_precision<fp32>} : vector<16x128xf32>, vector<128x128xf32>, vector<16x128xf32> -> vector<16x128xf32>
    %c0_4 = arith.constant 0 : index
    %c0_5 = arith.constant 0 : index
    %c0_6 = arith.constant 0 : index
    %9 = vector.load %arg5[%c0_4, %c0_5, %c0_6] : memref<1x16x128xf32, #tpu.memory_space<vmem>>, vector<1x16x128xf32>
    %10 = vector.shape_cast %9 : vector<1x16x128xf32> to vector<16x128xf32>
    %11 = vector.shape_cast %8 : vector<16x128xf32> to vector<1x16x128xf32>
    tpu.vector_store %arg5[%c0_4, %c0_5, %c0_6], %11 {strides = array<i32>} : memref<1x16x128xf32, #tpu.memory_space<vmem>>, vector<1x16x128xf32>,
    %c0_7 = arith.constant 0 : index
    %c0_8 = arith.constant 0 : index
    %c0_9 = arith.constant 0 : index
    %12 = vector.load %arg3[%c0_7, %c0_8, %c0_9] : memref<1x8x1xi32, #tpu.memory_space<vmem>>, vector<1x8x1xi32>
    %13 = vector.shape_cast %12 : vector<1x8x1xi32> to vector<8x1xi32>
    %14 = tpu.iota {dimensions = array<i32: 1>} : vector<8x128xi32>
    %15 = vector.broadcast %13 : vector<8x1xi32> to vector<8x128xi32>
    %16 = arith.cmpi eq, %15, %14 : vector<8x128xi32>
    %17 = arith.extui %16 : vector<8x128xi1> to vector<8x128xi32>
    %18 = arith.sitofp %17 : vector<8x128xi32> to vector<8x128xf32>
    %cst_10 = arith.constant dense<0.000000e+00> : vector<8x128xf32>
    %19 = tpu.matmul %18, %0, %cst_10 {dimension_numbers = #tpu.dot_dimension_numbers<[1], [0], [0], [1], [0, 0, 1, 1], [], []>, precision = #tpu.contract_precision<fp32>} : vector<8x128xf32>, vector<128x128xf32>, vector<8x128xf32> -> vector<8x128xf32>
    %c0_11 = arith.constant 0 : index
    %c0_12 = arith.constant 0 : index
    %c0_13 = arith.constant 0 : index
    %20 = vector.load %arg6[%c0_11, %c0_12, %c0_13] : memref<1x8x128xf32, #tpu.memory_space<vmem>>, vector<1x8x128xf32>
    %21 = vector.shape_cast %20 : vector<1x8x128xf32> to vector<8x128xf32>
    %22 = vector.shape_cast %19 : vector<8x128xf32> to vector<1x8x128xf32>
    tpu.vector_store %arg6[%c0_11, %c0_12, %c0_13], %22 {strides = array<i32>} : memref<1x8x128xf32, #tpu.memory_space<vmem>>, vector<1x8x128xf32>,
    return
  }
  func.func @transform_0(%arg0: i32, %arg1: i32) -> (i32, i32, i32) {
    %c0_i32 = arith.constant 0 : i32
    %c0_i32_0 = arith.constant 0 : i32
    return %arg0, %arg1, %c0_i32 : i32, i32, i32
  }
  func.func @transform_1(%arg0: i32, %arg1: i32) -> (i32, i32, i32) {
    %c0_i32 = arith.constant 0 : i32
    %c0_i32_0 = arith.constant 0 : i32
    return %arg0, %arg1, %c0_i32 : i32, i32, i32
  }
  func.func @transform_2(%arg0: i32, %arg1: i32) -> (i32, i32) {
    %c0_i32 = arith.constant 0 : i32
    %c0_i32_0 = arith.constant 0 : i32
    %c0_i32_1 = arith.constant 0 : i32
    return %c0_i32, %c0_i32_0 : i32, i32
  }
  func.func @transform_3(%arg0: i32, %arg1: i32) -> (i32, i32, i32) {
    %c0_i32 = arith.constant 0 : i32
    %c0_i32_0 = arith.constant 0 : i32
    return %arg0, %arg1, %c0_i32 : i32, i32, i32
  }
  func.func @transform_4(%arg0: i32, %arg1: i32) -> (i32, i32, i32) {
    %c0_i32 = arith.constant 0 : i32
    %c0_i32_0 = arith.constant 0 : i32
    return %arg0, %arg1, %c0_i32 : i32, i32, i32
  }
}

</mosaic_0001>

<llo_original>
// kernel: cp_embedding_forward.1
$region0: #{cp_embedding_forward.1}
  #allocation0 [shape = 'u32[]', space=smem, size = 0x4, offset = 0x4, fixed_abs, tag = 'smem constant byte address 0x4 - core index']
  #allocation1 [shape = 'u32[144,128]{1,0:T(1,128)}', space=vmem, size = 0x12000, scoped, tag = 'internal scratch']
  %s0 = inlined_call_operand.vmem [shape: s32[2,16,1], index: 0, kind: input, shape index: {}]
  %s1 = inlined_call_operand.vmem [shape: s32[2,8,1], index: 1, kind: input, shape index: {}]
  %s2 = inlined_call_operand.vmem [shape: f32[128,128], index: 2, kind: input, shape index: {}]
  %s3 = inlined_call_operand.hbm [shape: f32[2,16,128], index: 3, kind: output, shape index: {0}]
  %s4 = inlined_call_operand.hbm [shape: f32[2,8,128], index: 4, kind: output, shape index: {1}]
  %5 = xla_tuple %s3, %s4
  %s6 = sld [smem:[#allocation0]]
  $region53: #{cp_embedding_forward.1} parent=0
    _
  %s8 = ssub.s32 1, %s6
  %s9 = scalar_select 0, %s8, %s6
  $region1: #{cp_embedding_forward.1} parent=0
    #allocation2 [shape = 'u8[16384]{0}', space=vmem, size = 0x4000, scoped, tag = 'output window, operand 0']
    #allocation3 [shape = 's32[2]{0}', space=sflag, size = 0x8, scoped, tag = 'scoped memory for cp_embedding_forward.1']
    #allocation4 [shape = 'u8[8192]{0}', space=vmem, size = 0x2000, scoped, tag = 'output window, operand 1']
    #allocation5 [shape = 's32[2]{0}', space=sflag, size = 0x8, scoped, tag = 'scoped memory for cp_embedding_forward.1']
    %10 = vsyncpa [#allocation3], 0
    %s11 = scalar_lea.sflag [#allocation3], 1
    %12 = vsyncpa %s11, 0
    %13 = vsyncpa [#allocation5], 0
    %s14 = scalar_lea.sflag [#allocation5], 1
    %15 = vsyncpa %s14, 0
    loop: start=0, step=1, limit=4
    $region2: #{cp_embedding_forward.1} parent=1 // loop_pre_header
      _
    $region3: #{cp_embedding_forward.1} parent=1 // loop_header
      %s17 = sphi 0, %s21
      %p18 = scmp.ge.s32.totalorder %s17, 4
      %s24 = sphi 0, %s36
      %s25 = sphi 0, %s32
      %s26 = sphi 0, %s24
      %s27 = sphi 0, %s25
      %s28 = sphi 0, %s26
      %s29 = sphi 0, %s27
      %s41 = sphi 0, %s43
      %s44 = sphi 0, %s41
      %s45 = sphi 0, %s44
      %s61 = sphi 0, %s45
      %s69 = sphi 0, %s71
      %s72 = sphi 0, %s69
      %s73 = sphi 0, %s72
      %s89 = sphi 0, %s73
      %s93 = sphi 0, %s93
      %s95 = sphi 0, %s93
      %s96 = sphi 0, %s95
      %s110 = sphi 0, %s96
      %s118 = sphi 0, %s120
      %s121 = sphi 0, %s118
      %s122 = sphi 0, %s121
      %s138 = sphi 0, %s122
      %s146 = sphi 0, %s148
      %s149 = sphi 0, %s146
      %s150 = sphi 0, %s149
      %s166 = sphi 0, %s150
    $region4: #{cp_embedding_forward.1} parent=1 // loop_header_branch
      %20 = sbr.rel (%p18) target = $region8
    $region5: #{cp_embedding_forward.1} parent=1 // loop_body
      %s22 = ssub.s32 %s17, 1
      %s23 = ssub.s32 %s17, 2
      %s30 = sadd.s32 1, %s25
      %p31 = scmp.ge.s32.totalorder %s30, 1
      %s32 = scalar_select %p31, 0, %s30
      %s33 = sadd.s32 1, %s24
      %s34 = scalar_select %p31, %s33, %s24
      %p35 = scmp.ge.s32.totalorder %s34, 2
      %s36 = scalar_select %p35, 0, %s34
      %s37 = ssub.s32 %s24, %s36
      %s38 = ssub.s32 %s25, %s32
      %s39 = sor.u32 %s37, %s38
      %p40 = scmp.eq.s32.totalorder %s39, 0
      %s42 = sadd.s32 %s41, 1
      %s43 = scalar_select %p40, %s41, %s42
      %p46 = pneg %p40
      %p47 = scmp.eq.s32.totalorder %s17, 1
      %p48 = por %p46, %p47
      %p49 = scmp.ne.s32.totalorder %s41, %s44
      %p50 = scmp.eq.s32.totalorder %s17, 0
      %p51 = por %p49, %p50
      %p52 = scmp.ne.s32.totalorder %s41, %s44
      %p53 = scmp.eq.s32.totalorder %s22, 1
      %p54 = por %p52, %p53
      %p55 = scmp.ne.s32.totalorder %s44, %s45
      %p56 = scmp.eq.s32.totalorder %s22, 0
      %p57 = por %p55, %p56
      %p58 = scmp.ne.s32.totalorder %s44, %s45
      %p59 = scmp.eq.s32.totalorder %s23, 1
      %p60 = por %p58, %p59
      %p62 = scmp.ne.s32.totalorder %s45, %s61
      %p63 = scmp.eq.s32.totalorder %s23, 0
      %p64 = por %p62, %p63
      %s65 = ssub.s32 %s24, %s36
      %s66 = ssub.s32 %s25, %s32
      %s67 = sor.u32 %s65, %s66
      %p68 = scmp.eq.s32.totalorder %s67, 0
      %s70 = sadd.s32 %s69, 1
      %s71 = scalar_select %p68, %s69, %s70
      %p74 = pneg %p68
      %p75 = scmp.eq.s32.totalorder %s17, 1
      %p76 = por %p74, %p75
      %p77 = scmp.ne.s32.totalorder %s69, %s72
      %p78 = scmp.eq.s32.totalorder %s17, 0
      %p79 = por %p77, %p78
      %p80 = scmp.ne.s32.totalorder %s69, %s72
      %p81 = scmp.eq.s32.totalorder %s22, 1
      %p82 = por %p80, %p81
      %p83 = scmp.ne.s32.totalorder %s72, %s73
      %p84 = scmp.eq.s32.totalorder %s22, 0
      %p85 = por %p83, %p84
      %p86 = scmp.ne.s32.totalorder %s72, %s73
      %p87 = scmp.eq.s32.totalorder %s23, 1
      %p88 = por %p86, %p87
      %p90 = scmp.ne.s32.totalorder %s73, %s89
      %p91 = scmp.eq.s32.totalorder %s23, 0
      %p92 = por %p90, %p91
      %s94 = sadd.s32 %s93, 1
      %p97 = scmp.eq.s32.totalorder %s17, 1
      %p98 = scmp.ne.s32.totalorder %s93, %s95
      %p99 = scmp.eq.s32.totalorder %s17, 0
      %p100 = por %p98, %p99
      %p101 = scmp.ne.s32.totalorder %s93, %s95
      %p102 = scmp.eq.s32.totalorder %s22, 1
      %p103 = por %p101, %p102
      %p104 = scmp.ne.s32.totalorder %s95, %s96
      %p105 = scmp.eq.s32.totalorder %s22, 0
      %p106 = por %p104, %p105
      %p107 = scmp.ne.s32.totalorder %s95, %s96
      %p108 = scmp.eq.s32.totalorder %s23, 1
      %p109 = por %p107, %p108
      %p111 = scmp.ne.s32.totalorder %s96, %s110
      %p112 = scmp.eq.s32.totalorder %s23, 0
      %p113 = por %p111, %p112
      %s114 = ssub.s32 %s24, %s36
      %s115 = ssub.s32 %s25, %s32
      %s116 = sor.u32 %s114, %s115
      %p117 = scmp.eq.s32.totalorder %s116, 0
      %s119 = sadd.s32 %s118, 1
      %s120 = scalar_select %p117, %s118, %s119
      %p123 = pneg %p117
      %p124 = scmp.eq.s32.totalorder %s17, 1
      %p125 = por %p123, %p124
      %p126 = scmp.ne.s32.totalorder %s118, %s121
      %p127 = scmp.eq.s32.totalorder %s17, 0
      %p128 = por %p126, %p127
      %p129 = scmp.ne.s32.totalorder %s118, %s121
      %p130 = scmp.eq.s32.totalorder %s22, 1
      %p131 = por %p129, %p130
      %p132 = scmp.ne.s32.totalorder %s121, %s122
      %p133 = scmp.eq.s32.totalorder %s22, 0
      %p134 = por %p132, %p133
      %p135 = scmp.ne.s32.totalorder %s121, %s122
      %p136 = scmp.eq.s32.totalorder %s23, 1
      %p137 = por %p135, %p136
      %p139 = scmp.ne.s32.totalorder %s122, %s138
      %p140 = scmp.eq.s32.totalorder %s23, 0
      %p141 = por %p139, %p140
      %s142 = ssub.s32 %s24, %s36
      %s143 = ssub.s32 %s25, %s32
      %s144 = sor.u32 %s142, %s143
      %p145 = scmp.eq.s32.totalorder %s144, 0
      %s147 = sadd.s32 %s146, 1
      %s148 = scalar_select %p145, %s146, %s147
      %p151 = pneg %p145
      %p152 = scmp.eq.s32.totalorder %s17, 1
      %p153 = por %p151, %p152
      %p154 = scmp.ne.s32.totalorder %s146, %s149
      %p155 = scmp.eq.s32.totalorder %s17, 0
      %p156 = por %p154, %p155
      %p157 = scmp.ne.s32.totalorder %s146, %s149
      %p158 = scmp.eq.s32.totalorder %s22, 1
      %p159 = por %p157, %p158
      %p160 = scmp.ne.s32.totalorder %s149, %s150
      %p161 = scmp.eq.s32.totalorder %s22, 0
      %p162 = por %p160, %p161
      %p163 = scmp.ne.s32.totalorder %s149, %s150
      %p164 = scmp.eq.s32.totalorder %s23, 1
      %p165 = por %p163, %p164
      %p167 = scmp.ne.s32.totalorder %s150, %s166
      %p168 = scmp.eq.s32.totalorder %s23, 0
      %p169 = por %p167, %p168
      %p170 = scmp.le.s32.totalorder 1, %s17
      %p171 = scmp.lt.s32.totalorder %s17, 3
      %p172 = pnand %p170, %p171
      %p173 = pneg %p172
      // Predicated region
      $region9: #{cp_embedding_forward.1} parent=5 // pred_check
        _
      $region10: #{cp_embedding_forward.1} parent=5 // pred_check_branch
        %175 = sbr.rel (%p172) target = $region12
      $region11: #{cp_embedding_forward.1} parent=5 // pred_region
        %s176 = ssub.s32 %s17, 1
        // Predicated region
        $region13: #{cp_embedding_forward.1} parent=11 // pred_check
          %p177 = pneg %p106
        $region14: #{cp_embedding_forward.1} parent=11 // pred_check_branch
          %179 = sbr.rel (%p177) target = $region16
        $region15: #{cp_embedding_forward.1} parent=11 // pred_region
          _
        $region16: #{cp_embedding_forward.1} parent=11 // pred_fallthru
          _
      $region12: #{cp_embedding_forward.1} parent=5 // pred_fallthru
        _
      %p180 = scmp.lt.s32.totalorder %s17, 2
      // Predicated region
      $region17: #{cp_embedding_forward.1} parent=5 // pred_check
        %p181 = pneg %p180
      $region18: #{cp_embedding_forward.1} parent=5 // pred_check_branch
        %183 = sbr.rel (%p181) target = $region20
      $region19: #{cp_embedding_forward.1} parent=5 // pred_region
        // Predicated region
        $region21: #{cp_embedding_forward.1} parent=19 // pred_check
          %p184 = pneg %p51
        $region22: #{cp_embedding_forward.1} parent=19 // pred_check_branch
          %186 = sbr.rel (%p184) target = $region24
        $region23: #{cp_embedding_forward.1} parent=19 // pred_region
          %s187 = smul.u32 2, %s25
          %p188 = scmp.lt.s32.totalorder %s24, 1
          %s189 = scalar_select %p188, %s24, 1
          %p190 = scmp.lt.s32.totalorder %s187, 1
          %s191 = scalar_select %p190, %s187, 1
          %s192 = smul.addr %s189, 2
          %s193 = sadd.s32 %s191, %s192
          %s194 = smul.addr %s193, 8
          %s195 = scalar_lea.vmem %s0, %s194
          %s196 = smul.u32 2, %s25
        $region24: #{cp_embedding_forward.1} parent=19 // pred_fallthru
          _
        // Predicated region
        $region25: #{cp_embedding_forward.1} parent=19 // pred_check
          %p197 = pneg %p79
        $region26: #{cp_embedding_forward.1} parent=19 // pred_check_branch
          %199 = sbr.rel (%p197) target = $region28
        $region27: #{cp_embedding_forward.1} parent=19 // pred_region
          %p200 = scmp.lt.s32.totalorder %s24, 1
          %s201 = scalar_select %p200, %s24, 1
          %p202 = scmp.lt.s32.totalorder %s25, 0
          %s203 = scalar_select %p202, %s25, 0
          %s204 = sadd.s32 %s203, %s201
          %s205 = smul.addr %s204, 8
          %s206 = scalar_lea.vmem %s1, %s205
        $region28: #{cp_embedding_forward.1} parent=19 // pred_fallthru
          _
      $region20: #{cp_embedding_forward.1} parent=5 // pred_fallthru
        _
      %p207 = scmp.le.s32.totalorder 1, %s17
      %p208 = scmp.lt.s32.totalorder %s17, 3
      %p209 = pnand %p207, %p208
      %p210 = pneg %p209
      // Predicated region
      $region29: #{cp_embedding_forward.1} parent=5 // pred_check
        _
      $region30: #{cp_embedding_forward.1} parent=5 // pred_check_branch
        %212 = sbr.rel (%p209) target = $region32
      $region31: #{cp_embedding_forward.1} parent=5 // pred_region
        %s213 = ssub.s32 %s17, 1
        %s214 = smul.u32 2, %s27
        %p215 = scmp.lt.s32.totalorder %s26, 1
        %s216 = scalar_select %p215, %s26, 1
        %p217 = scmp.lt.s32.totalorder %s214, 1
        %s218 = scalar_select %p217, %s214, 1
        %s219 = smul.addr %s216, 2
        %s220 = sadd.s32 %s218, %s219
        %s221 = smul.addr %s220, 8
        %s222 = scalar_lea.vmem %s0, %s221
        %p223 = pneg %p57
        %p224 = pneg %p54
        %p225 = scmp.lt.s32.totalorder %s26, 1
        %s226 = scalar_select %p225, %s26, 1
        %p227 = scmp.lt.s32.totalorder %s27, 0
        %s228 = scalar_select %p227, %s27, 0
        %s229 = sadd.s32 %s228, %s226
        %s230 = smul.addr %s229, 8
        %s231 = scalar_lea.vmem %s1, %s230
        %p232 = pneg %p85
        %p233 = pneg %p82
        %p234 = pneg %p106
        %p235 = pneg %p103
        %p236 = pneg %p134
        %p237 = pneg %p131
        %s238 = sand.u32 %s121, 1
        %s239 = scalar_lea.sflag [#allocation3], %s238
        %s240 = sand.u32 %s121, 1
        %s241 = smul.addr %s240, 16
        %s242 = scalar_lea.vmem [#allocation2], %s241
        %p243 = pneg %p162
        %p244 = pneg %p159
        %s245 = sand.u32 %s149, 1
        %s246 = scalar_lea.sflag [#allocation5], %s245
        %s247 = sand.u32 %s149, 1
        %s248 = smul.addr %s247, 8
        %s249 = scalar_lea.vmem [#allocation4], %s248
        %s250 = smul.u32 2, %s27
        %p251 = scmp.lt.s32.totalorder %s26, 1
        %s252 = scalar_select %p251, %s26, 1
        %p253 = scmp.lt.s32.totalorder %s250, 1
        %s254 = scalar_select %p253, %s250, 1
        %s255 = smul.addr %s252, 2
        %s256 = sadd.s32 %s254, %s255
        %s257 = smul.addr %s256, 8
        %s258 = scalar_lea.vmem %s0, %s257
        %s259 = smul.u32 2, %s27
        %p260 = scmp.lt.s32.totalorder %s26, 1
        %s261 = scalar_select %p260, %s26, 1
        %p262 = scmp.lt.s32.totalorder %s27, 0
        %s263 = scalar_select %p262, %s27, 0
        %s264 = sadd.s32 %s263, %s261
        %s265 = smul.addr %s264, 8
        %s266 = scalar_lea.vmem %s1, %s265
        %s267 = smul.u32 2, %s27
        %v268 = vld [vmem:[%s2] sm:$0xff]
        %v269 = vld [vmem:[%s2 + $0x8] sm:$0xff]
        %v270 = vld [vmem:[%s2 + $0x10] sm:$0xff]
        %v271 = vld [vmem:[%s2 + $0x18] sm:$0xff]
        %v272 = vld [vmem:[%s2 + $0x20] sm:$0xff]
        %v273 = vld [vmem:[%s2 + $0x28] sm:$0xff]
        %v274 = vld [vmem:[%s2 + $0x30] sm:$0xff]
        %v275 = vld [vmem:[%s2 + $0x38] sm:$0xff]
        %v276 = vld [vmem:[%s2 + $0x40] sm:$0xff]
        %v277 = vld [vmem:[%s2 + $0x48] sm:$0xff]
        %v278 = vld [vmem:[%s2 + $0x50] sm:$0xff]
        %v279 = vld [vmem:[%s2 + $0x58] sm:$0xff]
        %v280 = vld [vmem:[%s2 + $0x60] sm:$0xff]
        %v281 = vld [vmem:[%s2 + $0x68] sm:$0xff]
        %v282 = vld [vmem:[%s2 + $0x70] sm:$0xff]
        %v283 = vld [vmem:[%s2 + $0x78] sm:$0xff]
        %v284 = vld [vmem:[%s258] sm:$0xff]
        %v285 = vld [vmem:[%s258 + $0x8] sm:$0xff]
        %v286 = vlaneseq
        %v287 = vand.u32 %v286, 127
        %288 = vset.pattern.permute.xlu0 0
        %289 = vperm.xlu0 %288, %v284
        %v290 = vpop.permute.xlu0 %289
        %291 = vset.pattern.permute.xlu0 0
        %292 = vperm.xlu0 %291, %v285
        %v293 = vpop.permute.xlu0 %292
        %vm294 = vcmp.eq.s32.totalorder %v290, %v287
        %vm295 = vcmp.eq.s32.totalorder %v293, %v287
        %v296 = vsel %vm294, 1, 0
        %v297 = vsel %vm295, 1, 0
        %v298 = vcvt.s32.f32 %v296
        %v299 = vcvt.s32.f32 %v297
        %300 = vmatprep.subr.mxu0 0.0
        %v301 = vand.u32 %v268, 4294901760
        %302 = vmatpush1.msra.mxu0 %v301
        %303 = vmatprep.subr.mxu0 0.0
        %v304 = vand.u32 %v269, 4294901760
        %305 = vmatpush1.msra.mxu0 %v304
        %306 = vmatprep.subr.mxu0 0.0
        %v307 = vand.u32 %v270, 4294901760
        %308 = vmatpush1.msra.mxu0 %v307
        %309 = vmatprep.subr.mxu0 0.0
        %v310 = vand.u32 %v271, 4294901760
        %311 = vmatpush1.msra.mxu0 %v310
        %312 = vmatprep.subr.mxu0 0.0
        %v313 = vand.u32 %v272, 4294901760
        %314 = vmatpush1.msra.mxu0 %v313
        %315 = vmatprep.subr.mxu0 0.0
        %v316 = vand.u32 %v273, 4294901760
        %317 = vmatpush1.msra.mxu0 %v316
        %318 = vmatprep.subr.mxu0 0.0
        %v319 = vand.u32 %v274, 4294901760
        %320 = vmatpush1.msra.mxu0 %v319
        %321 = vmatprep.subr.mxu0 0.0
        %v322 = vand.u32 %v275, 4294901760
        %323 = vmatpush1.msra.mxu0 %v322
        %324 = vmatprep.subr.mxu0 0.0
        %v325 = vand.u32 %v276, 4294901760
        %326 = vmatpush1.msra.mxu0 %v325
        %327 = vmatprep.subr.mxu0 0.0
        %v328 = vand.u32 %v277, 4294901760
        %329 = vmatpush1.msra.mxu0 %v328
        %330 = vmatprep.subr.mxu0 0.0
        %v331 = vand.u32 %v278, 4294901760
        %332 = vmatpush1.msra.mxu0 %v331
        %333 = vmatprep.subr.mxu0 0.0
        %v334 = vand.u32 %v279, 4294901760
        %335 = vmatpush1.msra.mxu0 %v334
        %336 = vmatprep.subr.mxu0 0.0
        %v337 = vand.u32 %v280, 4294901760
        %338 = vmatpush1.msra.mxu0 %v337
        %339 = vmatprep.subr.mxu0 0.0
        %v340 = vand.u32 %v281, 4294901760
        %341 = vmatpush1.msra.mxu0 %v340
        %342 = vmatprep.subr.mxu0 0.0
        %v343 = vand.u32 %v282, 4294901760
        %344 = vmatpush1.msra.mxu0 %v343
        %345 = vmatprep.subr.mxu0 0.0
        %v346 = vand.u32 %v283, 4294901760
        %347 = vmatpush1.msra.mxu0 %v346
        %348 = vmatprep.subr.mxu0 0.0
        %349 = vmatpush1.msra.mxu0 0.0
        %350 = vmatprep.subr.mxu0 0.0
        %351 = vmatpush1.msra.mxu0 0.0
        %352 = vmatprep.subr.mxu0 0.0
        %353 = vmatpush1.msra.mxu0 0.0
        %354 = vmatprep.subr.mxu0 0.0
        %355 = vmatpush1.msra.mxu0 0.0
        %356 = vmatprep.subr.mxu0 0.0
        %357 = vmatpush1.msra.mxu0 0.0
        %358 = vmatprep.subr.mxu0 0.0
        %359 = vmatpush1.msra.mxu0 0.0
        %360 = vmatprep.subr.mxu0 0.0
        %361 = vmatpush1.msra.mxu0 0.0
        %362 = vmatprep.subr.mxu0 0.0
        %363 = vmatpush1.msra.mxu0 0.0
        %364 = vmatprep.subr.mxu0 0.0
        %365 = vmatpush1.msra.mxu0 0.0
        %366 = vmatprep.subr.mxu0 0.0
        %367 = vmatpush1.msra.mxu0 0.0
        %368 = vmatprep.subr.mxu0 0.0
        %369 = vmatpush1.msra.mxu0 0.0
        %370 = vmatprep.subr.mxu0 0.0
        %371 = vmatpush1.msra.mxu0 0.0
        %372 = vmatprep.subr.mxu0 0.0
        %373 = vmatpush1.msra.mxu0 0.0
        %374 = vmatprep.subr.mxu0 0.0
        %375 = vmatpush1.msra.mxu0 0.0
        %376 = vmatprep.subr.mxu0 0.0
        %377 = vmatpush1.msra.mxu0 0.0
        %378 = vmatprep.subr.mxu0 0.0
        %379 = vmatpush1.msra.mxu0 0.0
        %380 = vmatprep.mubr.f32.mxu0 0.0
        %v381 = vand.u32 %v298, 4294901760
        %v382 = vsub.f32 %v298, %v381
        %v383 = vand.u32 %v382, 4294901760
        %v384 = vsub.f32 %v382, %v383
        %v385 = vand.u32 %v384, 4294901760
        %386 = vmatmul.mubr.f32.gmra.mrb[0].mxu0 %v385
        %v387 = vpop.f32.mrb[0].mxu0
        %v388 = vadd.f32 0.0, %v387
        %v389 = vpop.f32.mrb[0].mxu0
        %390 = vmatprep.mubr.f32.mxu0 0.0
        %v391 = vand.u32 %v299, 4294901760
        %v392 = vsub.f32 %v299, %v391
        %v393 = vand.u32 %v392, 4294901760
        %v394 = vsub.f32 %v392, %v393
        %v395 = vand.u32 %v394, 4294901760
        %396 = vmatmul.mubr.f32.gmra.mrb[0].mxu0 %v395
        %v397 = vpop.f32.mrb[0].mxu0
        %v398 = vadd.f32 0.0, %v397
        %v399 = vpop.f32.mrb[0].mxu0
        %400 = vdwg.mxu0
        %401 = vmatprep.subr.mxu0 0.0
        %v402 = vand.u32 %v268, 4294901760
        %v403 = vsub.f32 %v268, %v402
        %v404 = vand.u32 %v403, 4294901760
        %v405 = vsub.f32 %v403, %v404
        %v406 = vand.u32 %v405, 4294901760
        %407 = vmatpush1.msra.mxu0 %v406
        %408 = vmatprep.subr.mxu0 0.0
        %v409 = vand.u32 %v269, 4294901760
        %v410 = vsub.f32 %v269, %v409
        %v411 = vand.u32 %v410, 4294901760
        %v412 = vsub.f32 %v410, %v411
        %v413 = vand.u32 %v412, 4294901760
        %414 = vmatpush1.msra.mxu0 %v413
        %415 = vmatprep.subr.mxu0 0.0
        %v416 = vand.u32 %v270, 4294901760
        %v417 = vsub.f32 %v270, %v416
        %v418 = vand.u32 %v417, 4294901760
        %v419 = vsub.f32 %v417, %v418
        %v420 = vand.u32 %v419, 4294901760
        %421 = vmatpush1.msra.mxu0 %v420
        %422 = vmatprep.subr.mxu0 0.0
        %v423 = vand.u32 %v271, 4294901760
        %v424 = vsub.f32 %v271, %v423
        %v425 = vand.u32 %v424, 4294901760
        %v426 = vsub.f32 %v424, %v425
        %v427 = vand.u32 %v426, 4294901760
        %428 = vmatpush1.msra.mxu0 %v427
        %429 = vmatprep.subr.mxu0 0.0
        %v430 = vand.u32 %v272, 4294901760
        %v431 = vsub.f32 %v272, %v430
        %v432 = vand.u32 %v431, 4294901760
        %v433 = vsub.f32 %v431, %v432
        %v434 = vand.u32 %v433, 4294901760
        %435 = vmatpush1.msra.mxu0 %v434
        %436 = vmatprep.subr.mxu0 0.0
        %v437 = vand.u32 %v273, 4294901760
        %v438 = vsub.f32 %v273, %v437
        %v439 = vand.u32 %v438, 4294901760
        %v440 = vsub.f32 %v438, %v439
        %v441 = vand.u32 %v440, 4294901760
        %442 = vmatpush1.msra.mxu0 %v441
        %443 = vmatprep.subr.mxu0 0.0
        %v444 = vand.u32 %v274, 4294901760
        %v445 = vsub.f32 %v274, %v444
        %v446 = vand.u32 %v445, 4294901760
        %v447 = vsub.f32 %v445, %v446
        %v448 = vand.u32 %v447, 4294901760
        %449 = vmatpush1.msra.mxu0 %v448
        %450 = vmatprep.subr.mxu0 0.0
        %v451 = vand.u32 %v275, 4294901760
        %v452 = vsub.f32 %v275, %v451
        %v453 = vand.u32 %v452, 4294901760
        %v454 = vsub.f32 %v452, %v453
        %v455 = vand.u32 %v454, 4294901760
        %456 = vmatpush1.msra.mxu0 %v455
        %457 = vmatprep.subr.mxu0 0.0
        %v458 = vand.u32 %v276, 4294901760
        %v459 = vsub.f32 %v276, %v458
        %v460 = vand.u32 %v459, 4294901760
        %v461 = vsub.f32 %v459, %v460
        %v462 = vand.u32 %v461, 4294901760
        %463 = vmatpush1.msra.mxu0 %v462
        %464 = vmatprep.subr.mxu0 0.0
        %v465 = vand.u32 %v277, 4294901760
        %v466 = vsub.f32 %v277, %v465
        %v467 = vand.u32 %v466, 4294901760
        %v468 = vsub.f32 %v466, %v467
        %v469 = vand.u32 %v468, 4294901760
        %470 = vmatpush1.msra.mxu0 %v469
        %471 = vmatprep.subr.mxu0 0.0
        %v472 = vand.u32 %v278, 4294901760
        %v473 = vsub.f32 %v278, %v472
        %v474 = vand.u32 %v473, 4294901760
        %v475 = vsub.f32 %v473, %v474
        %v476 = vand.u32 %v475, 4294901760
        %477 = vmatpush1.msra.mxu0 %v476
        %478 = vmatprep.subr.mxu0 0.0
        %v479 = vand.u32 %v279, 4294901760
        %v480 = vsub.f32 %v279, %v479
        %v481 = vand.u32 %v480, 4294901760
        %v482 = vsub.f32 %v480, %v481
        %v483 = vand.u32 %v482, 4294901760
        %484 = vmatpush1.msra.mxu0 %v483
        %485 = vmatprep.subr.mxu0 0.0
        %v486 = vand.u32 %v280, 4294901760
        %v487 = vsub.f32 %v280, %v486
        %v488 = vand.u32 %v487, 4294901760
        %v489 = vsub.f32 %v487, %v488
        %v490 = vand.u32 %v489, 4294901760
        %491 = vmatpush1.msra.mxu0 %v490
        %492 = vmatprep.subr.mxu0 0.0
        %v493 = vand.u32 %v281, 4294901760
        %v494 = vsub.f32 %v281, %v493
        %v495 = vand.u32 %v494, 4294901760
        %v496 = vsub.f32 %v494, %v495
        %v497 = vand.u32 %v496, 4294901760
        %498 = vmatpush1.msra.mxu0 %v497
        %499 = vmatprep.subr.mxu0 0.0
        %v500 = vand.u32 %v282, 4294901760
        %v501 = vsub.f32 %v282, %v500
        %v502 = vand.u32 %v501, 4294901760
        %v503 = vsub.f32 %v501, %v502
        %v504 = vand.u32 %v503, 4294901760
        %505 = vmatpush1.msra.mxu0 %v504
        %506 = vmatprep.subr.mxu0 0.0
        %v507 = vand.u32 %v283, 4294901760
        %v508 = vsub.f32 %v283, %v507
        %v509 = vand.u32 %v508, 4294901760
        %v510 = vsub.f32 %v508, %v509
        %v511 = vand.u32 %v510, 4294901760
        %512 = vmatpush1.msra.mxu0 %v511
        %513 = vmatprep.subr.mxu0 0.0
        %514 = vmatpush1.msra.mxu0 0.0
        %515 = vmatprep.subr.mxu0 0.0
        %516 = vmatpush1.msra.mxu0 0.0
        %517 = vmatprep.subr.mxu0 0.0
        %518 = vmatpush1.msra.mxu0 0.0
        %519 = vmatprep.subr.mxu0 0.0
        %520 = vmatpush1.msra.mxu0 0.0
        %521 = vmatprep.subr.mxu0 0.0
        %522 = vmatpush1.msra.mxu0 0.0
        %523 = vmatprep.subr.mxu0 0.0
        %524 = vmatpush1.msra.mxu0 0.0
        %525 = vmatprep.subr.mxu0 0.0
        %526 = vmatpush1.msra.mxu0 0.0
        %527 = vmatprep.subr.mxu0 0.0
        %528 = vmatpush1.msra.mxu0 0.0
        %529 = vmatprep.subr.mxu0 0.0
        %530 = vmatpush1.msra.mxu0 0.0
        %531 = vmatprep.subr.mxu0 0.0
        %532 = vmatpush1.msra.mxu0 0.0
        %533 = vmatprep.subr.mxu0 0.0
        %534 = vmatpush1.msra.mxu0 0.0
        %535 = vmatprep.subr.mxu0 0.0
        %536 = vmatpush1.msra.mxu0 0.0
        %537 = vmatprep.subr.mxu0 0.0
        %538 = vmatpush1.msra.mxu0 0.0
        %539 = vmatprep.subr.mxu0 0.0
        %540 = vmatpush1.msra.mxu0 0.0
        %541 = vmatprep.subr.mxu0 0.0
        %542 = vmatpush1.msra.mxu0 0.0
        %543 = vmatprep.subr.mxu0 0.0
        %544 = vmatpush1.msra.mxu0 0.0
        %545 = vmatprep.mubr.f32.mxu0 0.0
        %v546 = vand.u32 %v298, 4294901760
        %547 = vmatmul.mubr.f32.gmra.mrb[0].mxu0 %v546
        %v548 = vpop.f32.mrb[0].mxu0
        %v549 = vadd.f32 %v388, %v548
        %v550 = vpop.f32.mrb[0].mxu0
        %551 = vmatprep.mubr.f32.mxu0 0.0
        %v552 = vand.u32 %v299, 4294901760
        %553 = vmatmul.mubr.f32.gmra.mrb[0].mxu0 %v552
        %v554 = vpop.f32.mrb[0].mxu0
        %v555 = vadd.f32 %v398, %v554
        %v556 = vpop.f32.mrb[0].mxu0
        %557 = vdwg.mxu0
        %558 = vmatprep.subr.mxu0 0.0
        %v559 = vand.u32 %v268, 4294901760
        %v560 = vsub.f32 %v268, %v559
        %561 = vmatpush1.msra.mxu0 %v560
        %562 = vmatprep.subr.mxu0 0.0
        %v563 = vand.u32 %v269, 4294901760
        %v564 = vsub.f32 %v269, %v563
        %565 = vmatpush1.msra.mxu0 %v564
        %566 = vmatprep.subr.mxu0 0.0
        %v567 = vand.u32 %v270, 4294901760
        %v568 = vsub.f32 %v270, %v567
        %569 = vmatpush1.msra.mxu0 %v568
        %570 = vmatprep.subr.mxu0 0.0
        %v571 = vand.u32 %v271, 4294901760
        %v572 = vsub.f32 %v271, %v571
        %573 = vmatpush1.msra.mxu0 %v572
        %574 = vmatprep.subr.mxu0 0.0
        %v575 = vand.u32 %v272, 4294901760
        %v576 = vsub.f32 %v272, %v575
        %577 = vmatpush1.msra.mxu0 %v576
        %578 = vmatprep.subr.mxu0 0.0
        %v579 = vand.u32 %v273, 4294901760
        %v580 = vsub.f32 %v273, %v579
        %581 = vmatpush1.msra.mxu0 %v580
        %582 = vmatprep.subr.mxu0 0.0
        %v583 = vand.u32 %v274, 4294901760
        %v584 = vsub.f32 %v274, %v583
        %585 = vmatpush1.msra.mxu0 %v584
        %586 = vmatprep.subr.mxu0 0.0
        %v587 = vand.u32 %v275, 4294901760
        %v588 = vsub.f32 %v275, %v587
        %589 = vmatpush1.msra.mxu0 %v588
        %590 = vmatprep.subr.mxu0 0.0
        %v591 = vand.u32 %v276, 4294901760
        %v592 = vsub.f32 %v276, %v591
        %593 = vmatpush1.msra.mxu0 %v592
        %594 = vmatprep.subr.mxu0 0.0
        %v595 = vand.u32 %v277, 4294901760
        %v596 = vsub.f32 %v277, %v595
        %597 = vmatpush1.msra.mxu0 %v596
        %598 = vmatprep.subr.mxu0 0.0
        %v599 = vand.u32 %v278, 4294901760
        %v600 = vsub.f32 %v278, %v599
        %601 = vmatpush1.msra.mxu0 %v600
        %602 = vmatprep.subr.mxu0 0.0
        %v603 = vand.u32 %v279, 4294901760
        %v604 = vsub.f32 %v279, %v603
        %605 = vmatpush1.msra.mxu0 %v604
        %606 = vmatprep.subr.mxu0 0.0
        %v607 = vand.u32 %v280, 4294901760
        %v608 = vsub.f32 %v280, %v607
        %609 = vmatpush1.msra.mxu0 %v608
        %610 = vmatprep.subr.mxu0 0.0
        %v611 = vand.u32 %v281, 4294901760
        %v612 = vsub.f32 %v281, %v611
        %613 = vmatpush1.msra.mxu0 %v612
        %614 = vmatprep.subr.mxu0 0.0
        %v615 = vand.u32 %v282, 4294901760
        %v616 = vsub.f32 %v282, %v615
        %617 = vmatpush1.msra.mxu0 %v616
        %618 = vmatprep.subr.mxu0 0.0
        %v619 = vand.u32 %v283, 4294901760
        %v620 = vsub.f32 %v283, %v619
        %621 = vmatpush1.msra.mxu0 %v620
        %622 = vmatprep.subr.mxu0 0.0
        %623 = vmatpush1.msra.mxu0 0.0
        %624 = vmatprep.subr.mxu0 0.0
        %625 = vmatpush1.msra.mxu0 0.0
        %626 = vmatprep.subr.mxu0 0.0
        %627 = vmatpush1.msra.mxu0 0.0
        %628 = vmatprep.subr.mxu0 0.0
        %629 = vmatpush1.msra.mxu0 0.0
        %630 = vmatprep.subr.mxu0 0.0
        %631 = vmatpush1.msra.mxu0 0.0
        %632 = vmatprep.subr.mxu0 0.0
        %633 = vmatpush1.msra.mxu0 0.0
        %634 = vmatprep.subr.mxu0 0.0
        %635 = vmatpush1.msra.mxu0 0.0
        %636 = vmatprep.subr.mxu0 0.0
        %637 = vmatpush1.msra.mxu0 0.0
        %638 = vmatprep.subr.mxu0 0.0
        %639 = vmatpush1.msra.mxu0 0.0
        %640 = vmatprep.subr.mxu0 0.0
        %641 = vmatpush1.msra.mxu0 0.0
        %642 = vmatprep.subr.mxu0 0.0
        %643 = vmatpush1.msra.mxu0 0.0
        %644 = vmatprep.subr.mxu0 0.0
        %645 = vmatpush1.msra.mxu0 0.0
        %646 = vmatprep.subr.mxu0 0.0
        %647 = vmatpush1.msra.mxu0 0.0
        %648 = vmatprep.subr.mxu0 0.0
        %649 = vmatpush1.msra.mxu0 0.0
        %650 = vmatprep.subr.mxu0 0.0
        %651 = vmatpush1.msra.mxu0 0.0
        %652 = vmatprep.subr.mxu0 0.0
        %653 = vmatpush1.msra.mxu0 0.0
        %654 = vmatprep.mubr.f32.mxu0 0.0
        %v655 = vand.u32 %v298, 4294901760
        %v656 = vsub.f32 %v298, %v655
        %657 = vmatmul.mubr.f32.gmra.mrb[0].mxu0 %v656
        %v658 = vpop.f32.mrb[0].mxu0
        %v659 = vadd.f32 %v549, %v658
        %v660 = vpop.f32.mrb[0].mxu0
        %661 = vmatprep.mubr.f32.mxu0 0.0
        %v662 = vand.u32 %v299, 4294901760
        %v663 = vsub.f32 %v299, %v662
        %664 = vmatmul.mubr.f32.gmra.mrb[0].mxu0 %v663
        %v665 = vpop.f32.mrb[0].mxu0
        %v666 = vadd.f32 %v555, %v665
        %v667 = vpop.f32.mrb[0].mxu0
        %668 = vdwg.mxu0
        %669 = vmatprep.subr.mxu0 0.0
        %v670 = vand.u32 %v268, 4294901760
        %671 = vmatpush1.msra.mxu0 %v670
        %672 = vmatprep.subr.mxu0 0.0
        %v673 = vand.u32 %v269, 4294901760
        %674 = vmatpush1.msra.mxu0 %v673
        %675 = vmatprep.subr.mxu0 0.0
        %v676 = vand.u32 %v270, 4294901760
        %677 = vmatpush1.msra.mxu0 %v676
        %678 = vmatprep.subr.mxu0 0.0
        %v679 = vand.u32 %v271, 4294901760
        %680 = vmatpush1.msra.mxu0 %v679
        %681 = vmatprep.subr.mxu0 0.0
        %v682 = vand.u32 %v272, 4294901760
        %683 = vmatpush1.msra.mxu0 %v682
        %684 = vmatprep.subr.mxu0 0.0
        %v685 = vand.u32 %v273, 4294901760
        %686 = vmatpush1.msra.mxu0 %v685
        %687 = vmatprep.subr.mxu0 0.0
        %v688 = vand.u32 %v274, 4294901760
        %689 = vmatpush1.msra.mxu0 %v688
        %690 = vmatprep.subr.mxu0 0.0
        %v691 = vand.u32 %v275, 4294901760
        %692 = vmatpush1.msra.mxu0 %v691
        %693 = vmatprep.subr.mxu0 0.0
        %v694 = vand.u32 %v276, 4294901760
        %695 = vmatpush1.msra.mxu0 %v694
        %696 = vmatprep.subr.mxu0 0.0
        %v697 = vand.u32 %v277, 4294901760
        %698 = vmatpush1.msra.mxu0 %v697
        %699 = vmatprep.subr.mxu0 0.0
        %v700 = vand.u32 %v278, 4294901760
        %701 = vmatpush1.msra.mxu0 %v700
        %702 = vmatprep.subr.mxu0 0.0
        %v703 = vand.u32 %v279, 4294901760
        %704 = vmatpush1.msra.mxu0 %v703
        %705 = vmatprep.subr.mxu0 0.0
        %v706 = vand.u32 %v280, 4294901760
        %707 = vmatpush1.msra.mxu0 %v706
        %708 = vmatprep.subr.mxu0 0.0
        %v709 = vand.u32 %v281, 4294901760
        %710 = vmatpush1.msra.mxu0 %v709
        %711 = vmatprep.subr.mxu0 0.0
        %v712 = vand.u32 %v282, 4294901760
        %713 = vmatpush1.msra.mxu0 %v712
        %714 = vmatprep.subr.mxu0 0.0
        %v715 = vand.u32 %v283, 4294901760
        %716 = vmatpush1.msra.mxu0 %v715
        %717 = vmatprep.subr.mxu0 0.0
        %718 = vmatpush1.msra.mxu0 0.0
        %719 = vmatprep.subr.mxu0 0.0
        %720 = vmatpush1.msra.mxu0 0.0
        %721 = vmatprep.subr.mxu0 0.0
        %722 = vmatpush1.msra.mxu0 0.0
        %723 = vmatprep.subr.mxu0 0.0
        %724 = vmatpush1.msra.mxu0 0.0
        %725 = vmatprep.subr.mxu0 0.0
        %726 = vmatpush1.msra.mxu0 0.0
        %727 = vmatprep.subr.mxu0 0.0
        %728 = vmatpush1.msra.mxu0 0.0
        %729 = vmatprep.subr.mxu0 0.0
        %730 = vmatpush1.msra.mxu0 0.0
        %731 = vmatprep.subr.mxu0 0.0
        %732 = vmatpush1.msra.mxu0 0.0
        %733 = vmatprep.subr.mxu0 0.0
        %734 = vmatpush1.msra.mxu0 0.0
        %735 = vmatprep.subr.mxu0 0.0
        %736 = vmatpush1.msra.mxu0 0.0
        %737 = vmatprep.subr.mxu0 0.0
        %738 = vmatpush1.msra.mxu0 0.0
        %739 = vmatprep.subr.mxu0 0.0
        %740 = vmatpush1.msra.mxu0 0.0
        %741 = vmatprep.subr.mxu0 0.0
        %742 = vmatpush1.msra.mxu0 0.0
        %743 = vmatprep.subr.mxu0 0.0
        %744 = vmatpush1.msra.mxu0 0.0
        %745 = vmatprep.subr.mxu0 0.0
        %746 = vmatpush1.msra.mxu0 0.0
        %747 = vmatprep.subr.mxu0 0.0
        %748 = vmatpush1.msra.mxu0 0.0
        %749 = vmatprep.mubr.f32.mxu0 0.0
        %v750 = vand.u32 %v298, 4294901760
        %v751 = vsub.f32 %v298, %v750
        %v752 = vand.u32 %v751, 4294901760
        %753 = vmatmul.mubr.f32.gmra.mrb[0].mxu0 %v752
        %v754 = vpop.f32.mrb[0].mxu0
        %v755 = vadd.f32 %v659, %v754
        %v756 = vpop.f32.mrb[0].mxu0
        %757 = vmatprep.mubr.f32.mxu0 0.0
        %v758 = vand.u32 %v299, 4294901760
        %v759 = vsub.f32 %v299, %v758
        %v760 = vand.u32 %v759, 4294901760
        %761 = vmatmul.mubr.f32.gmra.mrb[0].mxu0 %v760
        %v762 = vpop.f32.mrb[0].mxu0
        %v763 = vadd.f32 %v666, %v762
        %v764 = vpop.f32.mrb[0].mxu0
        %765 = vdwg.mxu0
        %766 = vmatprep.subr.mxu0 0.0
        %v767 = vand.u32 %v268, 4294901760
        %v768 = vsub.f32 %v268, %v767
        %v769 = vand.u32 %v768, 4294901760
        %770 = vmatpush1.msra.mxu0 %v769
        %771 = vmatprep.subr.mxu0 0.0
        %v772 = vand.u32 %v269, 4294901760
        %v773 = vsub.f32 %v269, %v772
        %v774 = vand.u32 %v773, 4294901760
        %775 = vmatpush1.msra.mxu0 %v774
        %776 = vmatprep.subr.mxu0 0.0
        %v777 = vand.u32 %v270, 4294901760
        %v778 = vsub.f32 %v270, %v777
        %v779 = vand.u32 %v778, 4294901760
        %780 = vmatpush1.msra.mxu0 %v779
        %781 = vmatprep.subr.mxu0 0.0
        %v782 = vand.u32 %v271, 4294901760
        %v783 = vsub.f32 %v271, %v782
        %v784 = vand.u32 %v783, 4294901760
        %785 = vmatpush1.msra.mxu0 %v784
        %786 = vmatprep.subr.mxu0 0.0
        %v787 = vand.u32 %v272, 4294901760
        %v788 = vsub.f32 %v272, %v787
        %v789 = vand.u32 %v788, 4294901760
        %790 = vmatpush1.msra.mxu0 %v789
        %791 = vmatprep.subr.mxu0 0.0
        %v792 = vand.u32 %v273, 4294901760
        %v793 = vsub.f32 %v273, %v792
        %v794 = vand.u32 %v793, 4294901760
        %795 = vmatpush1.msra.mxu0 %v794
        %796 = vmatprep.subr.mxu0 0.0
        %v797 = vand.u32 %v274, 4294901760
        %v798 = vsub.f32 %v274, %v797
        %v799 = vand.u32 %v798, 4294901760
        %800 = vmatpush1.msra.mxu0 %v799
        %801 = vmatprep.subr.mxu0 0.0
        %v802 = vand.u32 %v275, 4294901760
        %v803 = vsub.f32 %v275, %v802
        %v804 = vand.u32 %v803, 4294901760
        %805 = vmatpush1.msra.mxu0 %v804
        %806 = vmatprep.subr.mxu0 0.0
        %v807 = vand.u32 %v276, 4294901760
        %v808 = vsub.f32 %v276, %v807
        %v809 = vand.u32 %v808, 4294901760
        %810 = vmatpush1.msra.mxu0 %v809
        %811 = vmatprep.subr.mxu0 0.0
        %v812 = vand.u32 %v277, 4294901760
        %v813 = vsub.f32 %v277, %v812
        %v814 = vand.u32 %v813, 4294901760
        %815 = vmatpush1.msra.mxu0 %v814
        %816 = vmatprep.subr.mxu0 0.0
        %v817 = vand.u32 %v278, 4294901760
        %v818 = vsub.f32 %v278, %v817
        %v819 = vand.u32 %v818, 4294901760
        %820 = vmatpush1.msra.mxu0 %v819
        %821 = vmatprep.subr.mxu0 0.0
        %v822 = vand.u32 %v279, 4294901760
        %v823 = vsub.f32 %v279, %v822
        %v824 = vand.u32 %v823, 4294901760
        %825 = vmatpush1.msra.mxu0 %v824
        %826 = vmatprep.subr.mxu0 0.0
        %v827 = vand.u32 %v280, 4294901760
        %v828 = vsub.f32 %v280, %v827
        %v829 = vand.u32 %v828, 4294901760
        %830 = vmatpush1.msra.mxu0 %v829
        %831 = vmatprep.subr.mxu0 0.0
        %v832 = vand.u32 %v281, 4294901760
        %v833 = vsub.f32 %v281, %v832
        %v834 = vand.u32 %v833, 4294901760
        %835 = vmatpush1.msra.mxu0 %v834
        %836 = vmatprep.subr.mxu0 0.0
        %v837 = vand.u32 %v282, 4294901760
        %v838 = vsub.f32 %v282, %v837
        %v839 = vand.u32 %v838, 4294901760
        %840 = vmatpush1.msra.mxu0 %v839
        %841 = vmatprep.subr.mxu0 0.0
        %v842 = vand.u32 %v283, 4294901760
        %v843 = vsub.f32 %v283, %v842
        %v844 = vand.u32 %v843, 4294901760
        %845 = vmatpush1.msra.mxu0 %v844
        %846 = vmatprep.subr.mxu0 0.0
        %847 = vmatpush1.msra.mxu0 0.0
        %848 = vmatprep.subr.mxu0 0.0
        %849 = vmatpush1.msra.mxu0 0.0
        %850 = vmatprep.subr.mxu0 0.0
        %851 = vmatpush1.msra.mxu0 0.0
        %852 = vmatprep.subr.mxu0 0.0
        %853 = vmatpush1.msra.mxu0 0.0
        %854 = vmatprep.subr.mxu0 0.0
        %855 = vmatpush1.msra.mxu0 0.0
        %856 = vmatprep.subr.mxu0 0.0
        %857 = vmatpush1.msra.mxu0 0.0
        %858 = vmatprep.subr.mxu0 0.0
        %859 = vmatpush1.msra.mxu0 0.0
        %860 = vmatprep.subr.mxu0 0.0
        %861 = vmatpush1.msra.mxu0 0.0
        %862 = vmatprep.subr.mxu0 0.0
        %863 = vmatpush1.msra.mxu0 0.0
        %864 = vmatprep.subr.mxu0 0.0
        %865 = vmatpush1.msra.mxu0 0.0
        %866 = vmatprep.subr.mxu0 0.0
        %867 = vmatpush1.msra.mxu0 0.0
        %868 = vmatprep.subr.mxu0 0.0
        %869 = vmatpush1.msra.mxu0 0.0
        %870 = vmatprep.subr.mxu0 0.0
        %871 = vmatpush1.msra.mxu0 0.0
        %872 = vmatprep.subr.mxu0 0.0
        %873 = vmatpush1.msra.mxu0 0.0
        %874 = vmatprep.subr.mxu0 0.0
        %875 = vmatpush1.msra.mxu0 0.0
        %876 = vmatprep.subr.mxu0 0.0
        %877 = vmatpush1.msra.mxu0 0.0
        %878 = vmatprep.mubr.f32.mxu0 0.0
        %v879 = vand.u32 %v298, 4294901760
        %880 = vmatmul.mubr.f32.gmra.mrb[0].mxu0 %v879
        %v881 = vpop.f32.mrb[0].mxu0
        %v882 = vadd.f32 %v755, %v881
        %v883 = vpop.f32.mrb[0].mxu0
        %884 = vmatprep.mubr.f32.mxu0 0.0
        %v885 = vand.u32 %v299, 4294901760
        %886 = vmatmul.mubr.f32.gmra.mrb[0].mxu0 %v885
        %v887 = vpop.f32.mrb[0].mxu0
        %v888 = vadd.f32 %v763, %v887
        %v889 = vpop.f32.mrb[0].mxu0
        %890 = vdwg.mxu0
        %891 = vmatprep.subr.mxu0 0.0
        %v892 = vand.u32 %v268, 4294901760
        %893 = vmatpush1.msra.mxu0 %v892
        %894 = vmatprep.subr.mxu0 0.0
        %v895 = vand.u32 %v269, 4294901760
        %896 = vmatpush1.msra.mxu0 %v895
        %897 = vmatprep.subr.mxu0 0.0
        %v898 = vand.u32 %v270, 4294901760
        %899 = vmatpush1.msra.mxu0 %v898
        %900 = vmatprep.subr.mxu0 0.0
        %v901 = vand.u32 %v271, 4294901760
        %902 = vmatpush1.msra.mxu0 %v901
        %903 = vmatprep.subr.mxu0 0.0
        %v904 = vand.u32 %v272, 4294901760
        %905 = vmatpush1.msra.mxu0 %v904
        %906 = vmatprep.subr.mxu0 0.0
        %v907 = vand.u32 %v273, 4294901760
        %908 = vmatpush1.msra.mxu0 %v907
        %909 = vmatprep.subr.mxu0 0.0
        %v910 = vand.u32 %v274, 4294901760
        %911 = vmatpush1.msra.mxu0 %v910
        %912 = vmatprep.subr.mxu0 0.0
        %v913 = vand.u32 %v275, 4294901760
        %914 = vmatpush1.msra.mxu0 %v913
        %915 = vmatprep.subr.mxu0 0.0
        %v916 = vand.u32 %v276, 4294901760
        %917 = vmatpush1.msra.mxu0 %v916
        %918 = vmatprep.subr.mxu0 0.0
        %v919 = vand.u32 %v277, 4294901760
        %920 = vmatpush1.msra.mxu0 %v919
        %921 = vmatprep.subr.mxu0 0.0
        %v922 = vand.u32 %v278, 4294901760
        %923 = vmatpush1.msra.mxu0 %v922
        %924 = vmatprep.subr.mxu0 0.0
        %v925 = vand.u32 %v279, 4294901760
        %926 = vmatpush1.msra.mxu0 %v925
        %927 = vmatprep.subr.mxu0 0.0
        %v928 = vand.u32 %v280, 4294901760
        %929 = vmatpush1.msra.mxu0 %v928
        %930 = vmatprep.subr.mxu0 0.0
        %v931 = vand.u32 %v281, 4294901760
        %932 = vmatpush1.msra.mxu0 %v931
        %933 = vmatprep.subr.mxu0 0.0
        %v934 = vand.u32 %v282, 4294901760
        %935 = vmatpush1.msra.mxu0 %v934
        %936 = vmatprep.subr.mxu0 0.0
        %v937 = vand.u32 %v283, 4294901760
        %938 = vmatpush1.msra.mxu0 %v937
        %939 = vmatprep.subr.mxu0 0.0
        %940 = vmatpush1.msra.mxu0 0.0
        %941 = vmatprep.subr.mxu0 0.0
        %942 = vmatpush1.msra.mxu0 0.0
        %943 = vmatprep.subr.mxu0 0.0
        %944 = vmatpush1.msra.mxu0 0.0
        %945 = vmatprep.subr.mxu0 0.0
        %946 = vmatpush1.msra.mxu0 0.0
        %947 = vmatprep.subr.mxu0 0.0
        %948 = vmatpush1.msra.mxu0 0.0
        %949 = vmatprep.subr.mxu0 0.0
        %950 = vmatpush1.msra.mxu0 0.0
        %951 = vmatprep.subr.mxu0 0.0
        %952 = vmatpush1.msra.mxu0 0.0
        %953 = vmatprep.subr.mxu0 0.0
        %954 = vmatpush1.msra.mxu0 0.0
        %955 = vmatprep.subr.mxu0 0.0
        %956 = vmatpush1.msra.mxu0 0.0
        %957 = vmatprep.subr.mxu0 0.0
        %958 = vmatpush1.msra.mxu0 0.0
        %959 = vmatprep.subr.mxu0 0.0
        %960 = vmatpush1.msra.mxu0 0.0
        %961 = vmatprep.subr.mxu0 0.0
        %962 = vmatpush1.msra.mxu0 0.0
        %963 = vmatprep.subr.mxu0 0.0
        %964 = vmatpush1.msra.mxu0 0.0
        %965 = vmatprep.subr.mxu0 0.0
        %966 = vmatpush1.msra.mxu0 0.0
        %967 = vmatprep.subr.mxu0 0.0
        %968 = vmatpush1.msra.mxu0 0.0
        %969 = vmatprep.subr.mxu0 0.0
        %970 = vmatpush1.msra.mxu0 0.0
        %971 = vmatprep.mubr.f32.mxu0 0.0
        %v972 = vand.u32 %v298, 4294901760
        %973 = vmatmul.mubr.f32.gmra.mrb[0].mxu0 %v972
        %v974 = vpop.f32.mrb[0].mxu0
        %v975 = vadd.f32 %v882, %v974
        %v976 = vpop.f32.mrb[0].mxu0
        %977 = vmatprep.mubr.f32.mxu0 0.0
        %v978 = vand.u32 %v299, 4294901760
        %979 = vmatmul.mubr.f32.gmra.mrb[0].mxu0 %v978
        %v980 = vpop.f32.mrb[0].mxu0
        %v981 = vadd.f32 %v888, %v980
        %v982 = vpop.f32.mrb[0].mxu0
        %983 = vdwg.mxu0
        %984 = vst [vmem:[%s242] sm:$0xff] %v975
        %985 = vst [vmem:[%s242 + $0x8] sm:$0xff] %v981
        %v986 = vld [vmem:[%s266] sm:$0xff]
        %987 = vset.pattern.permute.xlu0 0
        %988 = vperm.xlu0 %987, %v986
        %v989 = vpop.permute.xlu0 %988
        %vm990 = vcmp.eq.s32.totalorder %v989, %v287
        %v991 = vsel %vm990, 1, 0
        %v992 = vcvt.s32.f32 %v991
        %993 = vmatprep.subr.mxu0 0.0
        %v994 = vand.u32 %v268, 4294901760
        %995 = vmatpush1.msra.mxu0 %v994
        %996 = vmatprep.subr.mxu0 0.0
        %v997 = vand.u32 %v269, 4294901760
        %998 = vmatpush1.msra.mxu0 %v997
        %999 = vmatprep.subr.mxu0 0.0
        %v1000 = vand.u32 %v270, 4294901760
        %1001 = vmatpush1.msra.mxu0 %v1000
        %1002 = vmatprep.subr.mxu0 0.0
        %v1003 = vand.u32 %v271, 4294901760
        %1004 = vmatpush1.msra.mxu0 %v1003
        %1005 = vmatprep.subr.mxu0 0.0
        %v1006 = vand.u32 %v272, 4294901760
        %1007 = vmatpush1.msra.mxu0 %v1006
        %1008 = vmatprep.subr.mxu0 0.0
        %v1009 = vand.u32 %v273, 4294901760
        %1010 = vmatpush1.msra.mxu0 %v1009
        %1011 = vmatprep.subr.mxu0 0.0
        %v1012 = vand.u32 %v274, 4294901760
        %1013 = vmatpush1.msra.mxu0 %v1012
        %1014 = vmatprep.subr.mxu0 0.0
        %v1015 = vand.u32 %v275, 4294901760
        %1016 = vmatpush1.msra.mxu0 %v1015
        %1017 = vmatprep.subr.mxu0 0.0
        %v1018 = vand.u32 %v276, 4294901760
        %1019 = vmatpush1.msra.mxu0 %v1018
        %1020 = vmatprep.subr.mxu0 0.0
        %v1021 = vand.u32 %v277, 4294901760
        %1022 = vmatpush1.msra.mxu0 %v1021
        %1023 = vmatprep.subr.mxu0 0.0
        %v1024 = vand.u32 %v278, 4294901760
        %1025 = vmatpush1.msra.mxu0 %v1024
        %1026 = vmatprep.subr.mxu0 0.0
        %v1027 = vand.u32 %v279, 4294901760
        %1028 = vmatpush1.msra.mxu0 %v1027
        %1029 = vmatprep.subr.mxu0 0.0
        %v1030 = vand.u32 %v280, 4294901760
        %1031 = vmatpush1.msra.mxu0 %v1030
        %1032 = vmatprep.subr.mxu0 0.0
        %v1033 = vand.u32 %v281, 4294901760
        %1034 = vmatpush1.msra.mxu0 %v1033
        %1035 = vmatprep.subr.mxu0 0.0
        %v1036 = vand.u32 %v282, 4294901760
        %1037 = vmatpush1.msra.mxu0 %v1036
        %1038 = vmatprep.subr.mxu0 0.0
        %v1039 = vand.u32 %v283, 4294901760
        %1040 = vmatpush1.msra.mxu0 %v1039
        %1041 = vmatprep.subr.mxu0 0.0
        %1042 = vmatpush1.msra.mxu0 0.0
        %1043 = vmatprep.subr.mxu0 0.0
        %1044 = vmatpush1.msra.mxu0 0.0
        %1045 = vmatprep.subr.mxu0 0.0
        %1046 = vmatpush1.msra.mxu0 0.0
        %1047 = vmatprep.subr.mxu0 0.0
        %1048 = vmatpush1.msra.mxu0 0.0
        %1049 = vmatprep.subr.mxu0 0.0
        %1050 = vmatpush1.msra.mxu0 0.0
        %1051 = vmatprep.subr.mxu0 0.0
        %1052 = vmatpush1.msra.mxu0 0.0
        %1053 = vmatprep.subr.mxu0 0.0
        %1054 = vmatpush1.msra.mxu0 0.0
        %1055 = vmatprep.subr.mxu0 0.0
        %1056 = vmatpush1.msra.mxu0 0.0
        %1057 = vmatprep.subr.mxu0 0.0
        %1058 = vmatpush1.msra.mxu0 0.0
        %1059 = vmatprep.subr.mxu0 0.0
        %1060 = vmatpush1.msra.mxu0 0.0
        %1061 = vmatprep.subr.mxu0 0.0
        %1062 = vmatpush1.msra.mxu0 0.0
        %1063 = vmatprep.subr.mxu0 0.0
        %1064 = vmatpush1.msra.mxu0 0.0
        %1065 = vmatprep.subr.mxu0 0.0
        %1066 = vmatpush1.msra.mxu0 0.0
        %1067 = vmatprep.subr.mxu0 0.0
        %1068 = vmatpush1.msra.mxu0 0.0
        %1069 = vmatprep.subr.mxu0 0.0
        %1070 = vmatpush1.msra.mxu0 0.0
        %1071 = vmatprep.subr.mxu0 0.0
        %1072 = vmatpush1.msra.mxu0 0.0
        %1073 = vmatprep.mubr.f32.mxu0 0.0
        %v1074 = vand.u32 %v992, 4294901760
        %v1075 = vsub.f32 %v992, %v1074
        %v1076 = vand.u32 %v1075, 4294901760
        %v1077 = vsub.f32 %v1075, %v1076
        %v1078 = vand.u32 %v1077, 4294901760
        %1079 = vmatmul.mubr.f32.gmra.mrb[0].mxu0 %v1078
        %v1080 = vpop.f32.mrb[0].mxu0
        %v1081 = vadd.f32 0.0, %v1080
        %v1082 = vpop.f32.mrb[0].mxu0
        %1083 = vdwg.mxu0
        %1084 = vmatprep.subr.mxu0 0.0
        %v1085 = vand.u32 %v268, 4294901760
        %v1086 = vsub.f32 %v268, %v1085
        %v1087 = vand.u32 %v1086, 4294901760
        %v1088 = vsub.f32 %v1086, %v1087
        %v1089 = vand.u32 %v1088, 4294901760
        %1090 = vmatpush1.msra.mxu0 %v1089
        %1091 = vmatprep.subr.mxu0 0.0
        %v1092 = vand.u32 %v269, 4294901760
        %v1093 = vsub.f32 %v269, %v1092
        %v1094 = vand.u32 %v1093, 4294901760
        %v1095 = vsub.f32 %v1093, %v1094
        %v1096 = vand.u32 %v1095, 4294901760
        %1097 = vmatpush1.msra.mxu0 %v1096
        %1098 = vmatprep.subr.mxu0 0.0
        %v1099 = vand.u32 %v270, 4294901760
        %v1100 = vsub.f32 %v270, %v1099
        %v1101 = vand.u32 %v1100, 4294901760
        %v1102 = vsub.f32 %v1100, %v1101
        %v1103 = vand.u32 %v1102, 4294901760
        %1104 = vmatpush1.msra.mxu0 %v1103
        %1105 = vmatprep.subr.mxu0 0.0
        %v1106 = vand.u32 %v271, 4294901760
        %v1107 = vsub.f32 %v271, %v1106
        %v1108 = vand.u32 %v1107, 4294901760
        %v1109 = vsub.f32 %v1107, %v1108
        %v1110 = vand.u32 %v1109, 4294901760
        %1111 = vmatpush1.msra.mxu0 %v1110
        %1112 = vmatprep.subr.mxu0 0.0
        %v1113 = vand.u32 %v272, 4294901760
        %v1114 = vsub.f32 %v272, %v1113
        %v1115 = vand.u32 %v1114, 4294901760
        %v1116 = vsub.f32 %v1114, %v1115
        %v1117 = vand.u32 %v1116, 4294901760
        %1118 = vmatpush1.msra.mxu0 %v1117
        %1119 = vmatprep.subr.mxu0 0.0
        %v1120 = vand.u32 %v273, 4294901760
        %v1121 = vsub.f32 %v273, %v1120
        %v1122 = vand.u32 %v1121, 4294901760
        %v1123 = vsub.f32 %v1121, %v1122
        %v1124 = vand.u32 %v1123, 4294901760
        %1125 = vmatpush1.msra.mxu0 %v1124
        %1126 = vmatprep.subr.mxu0 0.0
        %v1127 = vand.u32 %v274, 4294901760
        %v1128 = vsub.f32 %v274, %v1127
        %v1129 = vand.u32 %v1128, 4294901760
        %v1130 = vsub.f32 %v1128, %v1129
        %v1131 = vand.u32 %v1130, 4294901760
        %1132 = vmatpush1.msra.mxu0 %v1131
        %1133 = vmatprep.subr.mxu0 0.0
        %v1134 = vand.u32 %v275, 4294901760
        %v1135 = vsub.f32 %v275, %v1134
        %v1136 = vand.u32 %v1135, 4294901760
        %v1137 = vsub.f32 %v1135, %v1136
        %v1138 = vand.u32 %v1137, 4294901760
        %1139 = vmatpush1.msra.mxu0 %v1138
        %1140 = vmatprep.subr.mxu0 0.0
        %v1141 = vand.u32 %v276, 4294901760
        %v1142 = vsub.f32 %v276, %v1141
        %v1143 = vand.u32 %v1142, 4294901760
        %v1144 = vsub.f32 %v1142, %v1143
        %v1145 = vand.u32 %v1144, 4294901760
        %1146 = vmatpush1.msra.mxu0 %v1145
        %1147 = vmatprep.subr.mxu0 0.0
        %v1148 = vand.u32 %v277, 4294901760
        %v1149 = vsub.f32 %v277, %v1148
        %v1150 = vand.u32 %v1149, 4294901760
        %v1151 = vsub.f32 %v1149, %v1150
        %v1152 = vand.u32 %v1151, 4294901760
        %1153 = vmatpush1.msra.mxu0 %v1152
        %1154 = vmatprep.subr.mxu0 0.0
        %v1155 = vand.u32 %v278, 4294901760
        %v1156 = vsub.f32 %v278, %v1155
        %v1157 = vand.u32 %v1156, 4294901760
        %v1158 = vsub.f32 %v1156, %v1157
        %v1159 = vand.u32 %v1158, 4294901760
        %1160 = vmatpush1.msra.mxu0 %v1159
        %1161 = vmatprep.subr.mxu0 0.0
        %v1162 = vand.u32 %v279, 4294901760
        %v1163 = vsub.f32 %v279, %v1162
        %v1164 = vand.u32 %v1163, 4294901760
        %v1165 = vsub.f32 %v1163, %v1164
        %v1166 = vand.u32 %v1165, 4294901760
        %1167 = vmatpush1.msra.mxu0 %v1166
        %1168 = vmatprep.subr.mxu0 0.0
        %v1169 = vand.u32 %v280, 4294901760
        %v1170 = vsub.f32 %v280, %v1169
        %v1171 = vand.u32 %v1170, 4294901760
        %v1172 = vsub.f32 %v1170, %v1171
        %v1173 = vand.u32 %v1172, 4294901760
        %1174 = vmatpush1.msra.mxu0 %v1173
        %1175 = vmatprep.subr.mxu0 0.0
        %v1176 = vand.u32 %v281, 4294901760
        %v1177 = vsub.f32 %v281, %v1176
        %v1178 = vand.u32 %v1177, 4294901760
        %v1179 = vsub.f32 %v1177, %v1178
        %v1180 = vand.u32 %v1179, 4294901760
        %1181 = vmatpush1.msra.mxu0 %v1180
        %1182 = vmatprep.subr.mxu0 0.0
        %v1183 = vand.u32 %v282, 4294901760
        %v1184 = vsub.f32 %v282, %v1183
        %v1185 = vand.u32 %v1184, 4294901760
        %v1186 = vsub.f32 %v1184, %v1185
        %v1187 = vand.u32 %v1186, 4294901760
        %1188 = vmatpush1.msra.mxu0 %v1187
        %1189 = vmatprep.subr.mxu0 0.0
        %v1190 = vand.u32 %v283, 4294901760
        %v1191 = vsub.f32 %v283, %v1190
        %v1192 = vand.u32 %v1191, 4294901760
        %v1193 = vsub.f32 %v1191, %v1192
        %v1194 = vand.u32 %v1193, 4294901760
        %1195 = vmatpush1.msra.mxu0 %v1194
        %1196 = vmatprep.subr.mxu0 0.0
        %1197 = vmatpush1.msra.mxu0 0.0
        %1198 = vmatprep.subr.mxu0 0.0
        %1199 = vmatpush1.msra.mxu0 0.0
        %1200 = vmatprep.subr.mxu0 0.0
        %1201 = vmatpush1.msra.mxu0 0.0
        %1202 = vmatprep.subr.mxu0 0.0
        %1203 = vmatpush1.msra.mxu0 0.0
        %1204 = vmatprep.subr.mxu0 0.0
        %1205 = vmatpush1.msra.mxu0 0.0
        %1206 = vmatprep.subr.mxu0 0.0
        %1207 = vmatpush1.msra.mxu0 0.0
        %1208 = vmatprep.subr.mxu0 0.0
        %1209 = vmatpush1.msra.mxu0 0.0
        %1210 = vmatprep.subr.mxu0 0.0
        %1211 = vmatpush1.msra.mxu0 0.0
        %1212 = vmatprep.subr.mxu0 0.0
        %1213 = vmatpush1.msra.mxu0 0.0
        %1214 = vmatprep.subr.mxu0 0.0
        %1215 = vmatpush1.msra.mxu0 0.0
        %1216 = vmatprep.subr.mxu0 0.0
        %1217 = vmatpush1.msra.mxu0 0.0
        %1218 = vmatprep.subr.mxu0 0.0
        %1219 = vmatpush1.msra.mxu0 0.0
        %1220 = vmatprep.subr.mxu0 0.0
        %1221 = vmatpush1.msra.mxu0 0.0
        %1222 = vmatprep.subr.mxu0 0.0
        %1223 = vmatpush1.msra.mxu0 0.0
        %1224 = vmatprep.subr.mxu0 0.0
        %1225 = vmatpush1.msra.mxu0 0.0
        %1226 = vmatprep.subr.mxu0 0.0
        %1227 = vmatpush1.msra.mxu0 0.0
        %1228 = vmatprep.mubr.f32.mxu0 0.0
        %v1229 = vand.u32 %v992, 4294901760
        %1230 = vmatmul.mubr.f32.gmra.mrb[0].mxu0 %v1229
        %v1231 = vpop.f32.mrb[0].mxu0
        %v1232 = vadd.f32 %v1081, %v1231
        %v1233 = vpop.f32.mrb[0].mxu0
        %1234 = vdwg.mxu0
        %1235 = vmatprep.subr.mxu0 0.0
        %v1236 = vand.u32 %v268, 4294901760
        %v1237 = vsub.f32 %v268, %v1236
        %1238 = vmatpush1.msra.mxu0 %v1237
        %1239 = vmatprep.subr.mxu0 0.0
        %v1240 = vand.u32 %v269, 4294901760
        %v1241 = vsub.f32 %v269, %v1240
        %1242 = vmatpush1.msra.mxu0 %v1241
        %1243 = vmatprep.subr.mxu0 0.0
        %v1244 = vand.u32 %v270, 4294901760
        %v1245 = vsub.f32 %v270, %v1244
        %1246 = vmatpush1.msra.mxu0 %v1245
        %1247 = vmatprep.subr.mxu0 0.0
        %v1248 = vand.u32 %v271, 4294901760
        %v1249 = vsub.f32 %v271, %v1248
        %1250 = vmatpush1.msra.mxu0 %v1249
        %1251 = vmatprep.subr.mxu0 0.0
        %v1252 = vand.u32 %v272, 4294901760
        %v1253 = vsub.f32 %v272, %v1252
        %1254 = vmatpush1.msra.mxu0 %v1253
        %1255 = vmatprep.subr.mxu0 0.0
        %v1256 = vand.u32 %v273, 4294901760
        %v1257 = vsub.f32 %v273, %v1256
        %1258 = vmatpush1.msra.mxu0 %v1257
        %1259 = vmatprep.subr.mxu0 0.0
        %v1260 = vand.u32 %v274, 4294901760
        %v1261 = vsub.f32 %v274, %v1260
        %1262 = vmatpush1.msra.mxu0 %v1261
        %1263 = vmatprep.subr.mxu0 0.0
        %v1264 = vand.u32 %v275, 4294901760
        %v1265 = vsub.f32 %v275, %v1264
        %1266 = vmatpush1.msra.mxu0 %v1265
        %1267 = vmatprep.subr.mxu0 0.0
        %v1268 = vand.u32 %v276, 4294901760
        %v1269 = vsub.f32 %v276, %v1268
        %1270 = vmatpush1.msra.mxu0 %v1269
        %1271 = vmatprep.subr.mxu0 0.0
        %v1272 = vand.u32 %v277, 4294901760
        %v1273 = vsub.f32 %v277, %v1272
        %1274 = vmatpush1.msra.mxu0 %v1273
        %1275 = vmatprep.subr.mxu0 0.0
        %v1276 = vand.u32 %v278, 4294901760
        %v1277 = vsub.f32 %v278, %v1276
        %1278 = vmatpush1.msra.mxu0 %v1277
        %1279 = vmatprep.subr.mxu0 0.0
        %v1280 = vand.u32 %v279, 4294901760
        %v1281 = vsub.f32 %v279, %v1280
        %1282 = vmatpush1.msra.mxu0 %v1281
        %1283 = vmatprep.subr.mxu0 0.0
        %v1284 = vand.u32 %v280, 4294901760
        %v1285 = vsub.f32 %v280, %v1284
        %1286 = vmatpush1.msra.mxu0 %v1285
        %1287 = vmatprep.subr.mxu0 0.0
        %v1288 = vand.u32 %v281, 4294901760
        %v1289 = vsub.f32 %v281, %v1288
        %1290 = vmatpush1.msra.mxu0 %v1289
        %1291 = vmatprep.subr.mxu0 0.0
        %v1292 = vand.u32 %v282, 4294901760
        %v1293 = vsub.f32 %v282, %v1292
        %1294 = vmatpush1.msra.mxu0 %v1293
        %1295 = vmatprep.subr.mxu0 0.0
        %v1296 = vand.u32 %v283, 4294901760
        %v1297 = vsub.f32 %v283, %v1296
        %1298 = vmatpush1.msra.mxu0 %v1297
        %1299 = vmatprep.subr.mxu0 0.0
        %1300 = vmatpush1.msra.mxu0 0.0
        %1301 = vmatprep.subr.mxu0 0.0
        %1302 = vmatpush1.msra.mxu0 0.0
        %1303 = vmatprep.subr.mxu0 0.0
        %1304 = vmatpush1.msra.mxu0 0.0
        %1305 = vmatprep.subr.mxu0 0.0
        %1306 = vmatpush1.msra.mxu0 0.0
        %1307 = vmatprep.subr.mxu0 0.0
        %1308 = vmatpush1.msra.mxu0 0.0
        %1309 = vmatprep.subr.mxu0 0.0
        %1310 = vmatpush1.msra.mxu0 0.0
        %1311 = vmatprep.subr.mxu0 0.0
        %1312 = vmatpush1.msra.mxu0 0.0
        %1313 = vmatprep.subr.mxu0 0.0
        %1314 = vmatpush1.msra.mxu0 0.0
        %1315 = vmatprep.subr.mxu0 0.0
        %1316 = vmatpush1.msra.mxu0 0.0
        %1317 = vmatprep.subr.mxu0 0.0
        %1318 = vmatpush1.msra.mxu0 0.0
        %1319 = vmatprep.subr.mxu0 0.0
        %1320 = vmatpush1.msra.mxu0 0.0
        %1321 = vmatprep.subr.mxu0 0.0
        %1322 = vmatpush1.msra.mxu0 0.0
        %1323 = vmatprep.subr.mxu0 0.0
        %1324 = vmatpush1.msra.mxu0 0.0
        %1325 = vmatprep.subr.mxu0 0.0
        %1326 = vmatpush1.msra.mxu0 0.0
        %1327 = vmatprep.subr.mxu0 0.0
        %1328 = vmatpush1.msra.mxu0 0.0
        %1329 = vmatprep.subr.mxu0 0.0
        %1330 = vmatpush1.msra.mxu0 0.0
        %1331 = vmatprep.mubr.f32.mxu0 0.0
        %v1332 = vand.u32 %v992, 4294901760
        %v1333 = vsub.f32 %v992, %v1332
        %1334 = vmatmul.mubr.f32.gmra.mrb[0].mxu0 %v1333
        %v1335 = vpop.f32.mrb[0].mxu0
        %v1336 = vadd.f32 %v1232, %v1335
        %v1337 = vpop.f32.mrb[0].mxu0
        %1338 = vdwg.mxu0
        %1339 = vmatprep.subr.mxu0 0.0
        %v1340 = vand.u32 %v268, 4294901760
        %1341 = vmatpush1.msra.mxu0 %v1340
        %1342 = vmatprep.subr.mxu0 0.0
        %v1343 = vand.u32 %v269, 4294901760
        %1344 = vmatpush1.msra.mxu0 %v1343
        %1345 = vmatprep.subr.mxu0 0.0
        %v1346 = vand.u32 %v270, 4294901760
        %1347 = vmatpush1.msra.mxu0 %v1346
        %1348 = vmatprep.subr.mxu0 0.0
        %v1349 = vand.u32 %v271, 4294901760
        %1350 = vmatpush1.msra.mxu0 %v1349
        %1351 = vmatprep.subr.mxu0 0.0
        %v1352 = vand.u32 %v272, 4294901760
        %1353 = vmatpush1.msra.mxu0 %v1352
        %1354 = vmatprep.subr.mxu0 0.0
        %v1355 = vand.u32 %v273, 4294901760
        %1356 = vmatpush1.msra.mxu0 %v1355
        %1357 = vmatprep.subr.mxu0 0.0
        %v1358 = vand.u32 %v274, 4294901760
        %1359 = vmatpush1.msra.mxu0 %v1358
        %1360 = vmatprep.subr.mxu0 0.0
        %v1361 = vand.u32 %v275, 4294901760
        %1362 = vmatpush1.msra.mxu0 %v1361
        %1363 = vmatprep.subr.mxu0 0.0
        %v1364 = vand.u32 %v276, 4294901760
        %1365 = vmatpush1.msra.mxu0 %v1364
        %1366 = vmatprep.subr.mxu0 0.0
        %v1367 = vand.u32 %v277, 4294901760
        %1368 = vmatpush1.msra.mxu0 %v1367
        %1369 = vmatprep.subr.mxu0 0.0
        %v1370 = vand.u32 %v278, 4294901760
        %1371 = vmatpush1.msra.mxu0 %v1370
        %1372 = vmatprep.subr.mxu0 0.0
        %v1373 = vand.u32 %v279, 4294901760
        %1374 = vmatpush1.msra.mxu0 %v1373
        %1375 = vmatprep.subr.mxu0 0.0
        %v1376 = vand.u32 %v280, 4294901760
        %1377 = vmatpush1.msra.mxu0 %v1376
        %1378 = vmatprep.subr.mxu0 0.0
        %v1379 = vand.u32 %v281, 4294901760
        %1380 = vmatpush1.msra.mxu0 %v1379
        %1381 = vmatprep.subr.mxu0 0.0
        %v1382 = vand.u32 %v282, 4294901760
        %1383 = vmatpush1.msra.mxu0 %v1382
        %1384 = vmatprep.subr.mxu0 0.0
        %v1385 = vand.u32 %v283, 4294901760
        %1386 = vmatpush1.msra.mxu0 %v1385
        %1387 = vmatprep.subr.mxu0 0.0
        %1388 = vmatpush1.msra.mxu0 0.0
        %1389 = vmatprep.subr.mxu0 0.0
        %1390 = vmatpush1.msra.mxu0 0.0
        %1391 = vmatprep.subr.mxu0 0.0
        %1392 = vmatpush1.msra.mxu0 0.0
        %1393 = vmatprep.subr.mxu0 0.0
        %1394 = vmatpush1.msra.mxu0 0.0
        %1395 = vmatprep.subr.mxu0 0.0
        %1396 = vmatpush1.msra.mxu0 0.0
        %1397 = vmatprep.subr.mxu0 0.0
        %1398 = vmatpush1.msra.mxu0 0.0
        %1399 = vmatprep.subr.mxu0 0.0
        %1400 = vmatpush1.msra.mxu0 0.0
        %1401 = vmatprep.subr.mxu0 0.0
        %1402 = vmatpush1.msra.mxu0 0.0
        %1403 = vmatprep.subr.mxu0 0.0
        %1404 = vmatpush1.msra.mxu0 0.0
        %1405 = vmatprep.subr.mxu0 0.0
        %1406 = vmatpush1.msra.mxu0 0.0
        %1407 = vmatprep.subr.mxu0 0.0
        %1408 = vmatpush1.msra.mxu0 0.0
        %1409 = vmatprep.subr.mxu0 0.0
        %1410 = vmatpush1.msra.mxu0 0.0
        %1411 = vmatprep.subr.mxu0 0.0
        %1412 = vmatpush1.msra.mxu0 0.0
        %1413 = vmatprep.subr.mxu0 0.0
        %1414 = vmatpush1.msra.mxu0 0.0
        %1415 = vmatprep.subr.mxu0 0.0
        %1416 = vmatpush1.msra.mxu0 0.0
        %1417 = vmatprep.subr.mxu0 0.0
        %1418 = vmatpush1.msra.mxu0 0.0
        %1419 = vmatprep.mubr.f32.mxu0 0.0
        %v1420 = vand.u32 %v992, 4294901760
        %v1421 = vsub.f32 %v992, %v1420
        %v1422 = vand.u32 %v1421, 4294901760
        %1423 = vmatmul.mubr.f32.gmra.mrb[0].mxu0 %v1422
        %v1424 = vpop.f32.mrb[0].mxu0
        %v1425 = vadd.f32 %v1336, %v1424
        %v1426 = vpop.f32.mrb[0].mxu0
        %1427 = vdwg.mxu0
        %1428 = vmatprep.subr.mxu0 0.0
        %v1429 = vand.u32 %v268, 4294901760
        %v1430 = vsub.f32 %v268, %v1429
        %v1431 = vand.u32 %v1430, 4294901760
        %1432 = vmatpush1.msra.mxu0 %v1431
        %1433 = vmatprep.subr.mxu0 0.0
        %v1434 = vand.u32 %v269, 4294901760
        %v1435 = vsub.f32 %v269, %v1434
        %v1436 = vand.u32 %v1435, 4294901760
        %1437 = vmatpush1.msra.mxu0 %v1436
        %1438 = vmatprep.subr.mxu0 0.0
        %v1439 = vand.u32 %v270, 4294901760
        %v1440 = vsub.f32 %v270, %v1439
        %v1441 = vand.u32 %v1440, 4294901760
        %1442 = vmatpush1.msra.mxu0 %v1441
        %1443 = vmatprep.subr.mxu0 0.0
        %v1444 = vand.u32 %v271, 4294901760
        %v1445 = vsub.f32 %v271, %v1444
        %v1446 = vand.u32 %v1445, 4294901760
        %1447 = vmatpush1.msra.mxu0 %v1446
        %1448 = vmatprep.subr.mxu0 0.0
        %v1449 = vand.u32 %v272, 4294901760
        %v1450 = vsub.f32 %v272, %v1449
        %v1451 = vand.u32 %v1450, 4294901760
        %1452 = vmatpush1.msra.mxu0 %v1451
        %1453 = vmatprep.subr.mxu0 0.0
        %v1454 = vand.u32 %v273, 4294901760
        %v1455 = vsub.f32 %v273, %v1454
        %v1456 = vand.u32 %v1455, 4294901760
        %1457 = vmatpush1.msra.mxu0 %v1456
        %1458 = vmatprep.subr.mxu0 0.0
        %v1459 = vand.u32 %v274, 4294901760
        %v1460 = vsub.f32 %v274, %v1459
        %v1461 = vand.u32 %v1460, 4294901760
        %1462 = vmatpush1.msra.mxu0 %v1461
        %1463 = vmatprep.subr.mxu0 0.0
        %v1464 = vand.u32 %v275, 4294901760
        %v1465 = vsub.f32 %v275, %v1464
        %v1466 = vand.u32 %v1465, 4294901760
        %1467 = vmatpush1.msra.mxu0 %v1466
        %1468 = vmatprep.subr.mxu0 0.0
        %v1469 = vand.u32 %v276, 4294901760
        %v1470 = vsub.f32 %v276, %v1469
        %v1471 = vand.u32 %v1470, 4294901760
        %1472 = vmatpush1.msra.mxu0 %v1471
        %1473 = vmatprep.subr.mxu0 0.0
        %v1474 = vand.u32 %v277, 4294901760
        %v1475 = vsub.f32 %v277, %v1474
        %v1476 = vand.u32 %v1475, 4294901760
        %1477 = vmatpush1.msra.mxu0 %v1476
        %1478 = vmatprep.subr.mxu0 0.0
        %v1479 = vand.u32 %v278, 4294901760
        %v1480 = vsub.f32 %v278, %v1479
        %v1481 = vand.u32 %v1480, 4294901760
        %1482 = vmatpush1.msra.mxu0 %v1481
        %1483 = vmatprep.subr.mxu0 0.0
        %v1484 = vand.u32 %v279, 4294901760
        %v1485 = vsub.f32 %v279, %v1484
        %v1486 = vand.u32 %v1485, 4294901760
        %1487 = vmatpush1.msra.mxu0 %v1486
        %1488 = vmatprep.subr.mxu0 0.0
        %v1489 = vand.u32 %v280, 4294901760
        %v1490 = vsub.f32 %v280, %v1489
        %v1491 = vand.u32 %v1490, 4294901760
        %1492 = vmatpush1.msra.mxu0 %v1491
        %1493 = vmatprep.subr.mxu0 0.0
        %v1494 = vand.u32 %v281, 4294901760
        %v1495 = vsub.f32 %v281, %v1494
        %v1496 = vand.u32 %v1495, 4294901760
        %1497 = vmatpush1.msra.mxu0 %v1496
        %1498 = vmatprep.subr.mxu0 0.0
        %v1499 = vand.u32 %v282, 4294901760
        %v1500 = vsub.f32 %v282, %v1499
        %v1501 = vand.u32 %v1500, 4294901760
        %1502 = vmatpush1.msra.mxu0 %v1501
        %1503 = vmatprep.subr.mxu0 0.0
        %v1504 = vand.u32 %v283, 4294901760
        %v1505 = vsub.f32 %v283, %v1504
        %v1506 = vand.u32 %v1505, 4294901760
        %1507 = vmatpush1.msra.mxu0 %v1506
        %1508 = vmatprep.subr.mxu0 0.0
        %1509 = vmatpush1.msra.mxu0 0.0
        %1510 = vmatprep.subr.mxu0 0.0
        %1511 = vmatpush1.msra.mxu0 0.0
        %1512 = vmatprep.subr.mxu0 0.0
        %1513 = vmatpush1.msra.mxu0 0.0
        %1514 = vmatprep.subr.mxu0 0.0
        %1515 = vmatpush1.msra.mxu0 0.0
        %1516 = vmatprep.subr.mxu0 0.0
        %1517 = vmatpush1.msra.mxu0 0.0
        %1518 = vmatprep.subr.mxu0 0.0
        %1519 = vmatpush1.msra.mxu0 0.0
        %1520 = vmatprep.subr.mxu0 0.0
        %1521 = vmatpush1.msra.mxu0 0.0
        %1522 = vmatprep.subr.mxu0 0.0
        %1523 = vmatpush1.msra.mxu0 0.0
        %1524 = vmatprep.subr.mxu0 0.0
        %1525 = vmatpush1.msra.mxu0 0.0
        %1526 = vmatprep.subr.mxu0 0.0
        %1527 = vmatpush1.msra.mxu0 0.0
        %1528 = vmatprep.subr.mxu0 0.0
        %1529 = vmatpush1.msra.mxu0 0.0
        %1530 = vmatprep.subr.mxu0 0.0
        %1531 = vmatpush1.msra.mxu0 0.0
        %1532 = vmatprep.subr.mxu0 0.0
        %1533 = vmatpush1.msra.mxu0 0.0
        %1534 = vmatprep.subr.mxu0 0.0
        %1535 = vmatpush1.msra.mxu0 0.0
        %1536 = vmatprep.subr.mxu0 0.0
        %1537 = vmatpush1.msra.mxu0 0.0
        %1538 = vmatprep.subr.mxu0 0.0
        %1539 = vmatpush1.msra.mxu0 0.0
        %1540 = vmatprep.mubr.f32.mxu0 0.0
        %v1541 = vand.u32 %v992, 4294901760
        %1542 = vmatmul.mubr.f32.gmra.mrb[0].mxu0 %v1541
        %v1543 = vpop.f32.mrb[0].mxu0
        %v1544 = vadd.f32 %v1425, %v1543
        %v1545 = vpop.f32.mrb[0].mxu0
        %1546 = vdwg.mxu0
        %1547 = vmatprep.subr.mxu0 0.0
        %v1548 = vand.u32 %v268, 4294901760
        %1549 = vmatpush1.msra.mxu0 %v1548
        %1550 = vmatprep.subr.mxu0 0.0
        %v1551 = vand.u32 %v269, 4294901760
        %1552 = vmatpush1.msra.mxu0 %v1551
        %1553 = vmatprep.subr.mxu0 0.0
        %v1554 = vand.u32 %v270, 4294901760
        %1555 = vmatpush1.msra.mxu0 %v1554
        %1556 = vmatprep.subr.mxu0 0.0
        %v1557 = vand.u32 %v271, 4294901760
        %1558 = vmatpush1.msra.mxu0 %v1557
        %1559 = vmatprep.subr.mxu0 0.0
        %v1560 = vand.u32 %v272, 4294901760
        %1561 = vmatpush1.msra.mxu0 %v1560
        %1562 = vmatprep.subr.mxu0 0.0
        %v1563 = vand.u32 %v273, 4294901760
        %1564 = vmatpush1.msra.mxu0 %v1563
        %1565 = vmatprep.subr.mxu0 0.0
        %v1566 = vand.u32 %v274, 4294901760
        %1567 = vmatpush1.msra.mxu0 %v1566
        %1568 = vmatprep.subr.mxu0 0.0
        %v1569 = vand.u32 %v275, 4294901760
        %1570 = vmatpush1.msra.mxu0 %v1569
        %1571 = vmatprep.subr.mxu0 0.0
        %v1572 = vand.u32 %v276, 4294901760
        %1573 = vmatpush1.msra.mxu0 %v1572
        %1574 = vmatprep.subr.mxu0 0.0
        %v1575 = vand.u32 %v277, 4294901760
        %1576 = vmatpush1.msra.mxu0 %v1575
        %1577 = vmatprep.subr.mxu0 0.0
        %v1578 = vand.u32 %v278, 4294901760
        %1579 = vmatpush1.msra.mxu0 %v1578
        %1580 = vmatprep.subr.mxu0 0.0
        %v1581 = vand.u32 %v279, 4294901760
        %1582 = vmatpush1.msra.mxu0 %v1581
        %1583 = vmatprep.subr.mxu0 0.0
        %v1584 = vand.u32 %v280, 4294901760
        %1585 = vmatpush1.msra.mxu0 %v1584
        %1586 = vmatprep.subr.mxu0 0.0
        %v1587 = vand.u32 %v281, 4294901760
        %1588 = vmatpush1.msra.mxu0 %v1587
        %1589 = vmatprep.subr.mxu0 0.0
        %v1590 = vand.u32 %v282, 4294901760
        %1591 = vmatpush1.msra.mxu0 %v1590
        %1592 = vmatprep.subr.mxu0 0.0
        %v1593 = vand.u32 %v283, 4294901760
        %1594 = vmatpush1.msra.mxu0 %v1593
        %1595 = vmatprep.subr.mxu0 0.0
        %1596 = vmatpush1.msra.mxu0 0.0
        %1597 = vmatprep.subr.mxu0 0.0
        %1598 = vmatpush1.msra.mxu0 0.0
        %1599 = vmatprep.subr.mxu0 0.0
        %1600 = vmatpush1.msra.mxu0 0.0
        %1601 = vmatprep.subr.mxu0 0.0
        %1602 = vmatpush1.msra.mxu0 0.0
        %1603 = vmatprep.subr.mxu0 0.0
        %1604 = vmatpush1.msra.mxu0 0.0
        %1605 = vmatprep.subr.mxu0 0.0
        %1606 = vmatpush1.msra.mxu0 0.0
        %1607 = vmatprep.subr.mxu0 0.0
        %1608 = vmatpush1.msra.mxu0 0.0
        %1609 = vmatprep.subr.mxu0 0.0
        %1610 = vmatpush1.msra.mxu0 0.0
        %1611 = vmatprep.subr.mxu0 0.0
        %1612 = vmatpush1.msra.mxu0 0.0
        %1613 = vmatprep.subr.mxu0 0.0
        %1614 = vmatpush1.msra.mxu0 0.0
        %1615 = vmatprep.subr.mxu0 0.0
        %1616 = vmatpush1.msra.mxu0 0.0
        %1617 = vmatprep.subr.mxu0 0.0
        %1618 = vmatpush1.msra.mxu0 0.0
        %1619 = vmatprep.subr.mxu0 0.0
        %1620 = vmatpush1.msra.mxu0 0.0
        %1621 = vmatprep.subr.mxu0 0.0
        %1622 = vmatpush1.msra.mxu0 0.0
        %1623 = vmatprep.subr.mxu0 0.0
        %1624 = vmatpush1.msra.mxu0 0.0
        %1625 = vmatprep.subr.mxu0 0.0
        %1626 = vmatpush1.msra.mxu0 0.0
        %1627 = vmatprep.mubr.f32.mxu0 0.0
        %v1628 = vand.u32 %v992, 4294901760
        %1629 = vmatmul.mubr.f32.gmra.mrb[0].mxu0 %v1628
        %v1630 = vpop.f32.mrb[0].mxu0
        %v1631 = vadd.f32 %v1544, %v1630
        %v1632 = vpop.f32.mrb[0].mxu0
        %1633 = vdwg.mxu0
        %1634 = vst [vmem:[%s249] sm:$0xff] %v1631
        %s1635 = sand.u32 %s121, 1
        %s1636 = scalar_lea.sflag [#allocation3], %s1635
        %s1637 = sand.u32 %s121, 1
        %s1638 = smul.addr %s1637, 16
        %s1639 = scalar_lea.vmem [#allocation2], %s1638
        %s1640 = sand.u32 %s149, 1
        %s1641 = scalar_lea.sflag [#allocation5], %s1640
        %s1642 = sand.u32 %s149, 1
        %s1643 = smul.addr %s1642, 8
        %s1644 = scalar_lea.vmem [#allocation4], %s1643
        // Predicated region
        $region33: #{cp_embedding_forward.1} parent=31 // pred_check
          %p1645 = pneg %p131
        $region34: #{cp_embedding_forward.1} parent=31 // pred_check_branch
          %1647 = sbr.rel (%p1645) target = $region36
        $region35: #{cp_embedding_forward.1} parent=31 // pred_region
          %s1648 = smul.u32 2, %s27
          %s1650 = ssub.s32 256, 256
          %1651 = vsyncadd %s1636, %s1650
          %s1652 = smul.addr %s26, 2
          %s1653 = sadd.s32 %s1648, %s1652
          %s1654 = smul.addr %s1653, 128
          %s1655 = scalar_lea.hbm %s3, %s1654
          %s1656 = sshll.u32 %s1639, 4
          %s1657 = int_to_ptr.vmem [resolvable:$true] %s1656
          %1662 = dma.vmem_to_hbm [thread:$0]  %s1657, 256, %s1655, %s1636, 128, 128, 8
        $region36: #{cp_embedding_forward.1} parent=31 // pred_fallthru
          _
        // Predicated region
        $region37: #{cp_embedding_forward.1} parent=31 // pred_check
          %p1663 = pneg %p159
        $region38: #{cp_embedding_forward.1} parent=31 // pred_check_branch
          %1665 = sbr.rel (%p1663) target = $region40
        $region39: #{cp_embedding_forward.1} parent=31 // pred_region
          %s1667 = ssub.s32 128, 128
          %1668 = vsyncadd %s1641, %s1667
          %s1669 = sadd.s32 %s27, %s26
          %s1670 = smul.addr %s1669, 128
          %s1671 = scalar_lea.hbm %s4, %s1670
          %s1673 = sshll.u32 %s1644, 4
          %s1674 = int_to_ptr.vmem [resolvable:$true] %s1673
          %1676 = dma.vmem_to_hbm [thread:$0]  %s1674, 128, %s1671, %s1641
        $region40: #{cp_embedding_forward.1} parent=31 // pred_fallthru
          _
      $region32: #{cp_embedding_forward.1} parent=5 // pred_fallthru
        _
      %p1677 = scmp.le.s32.totalorder 2, %s17
      // Predicated region
      $region41: #{cp_embedding_forward.1} parent=5 // pred_check
        %p1678 = pneg %p1677
      $region42: #{cp_embedding_forward.1} parent=5 // pred_check_branch
        %1680 = sbr.rel (%p1678) target = $region44
      $region43: #{cp_embedding_forward.1} parent=5 // pred_region
        %s1681 = ssub.s32 %s17, 2
        // Predicated region
        $region45: #{cp_embedding_forward.1} parent=43 // pred_check
          %p1682 = pneg %p137
        $region46: #{cp_embedding_forward.1} parent=43 // pred_check_branch
          %1684 = sbr.rel (%p1682) target = $region48
        $region47: #{cp_embedding_forward.1} parent=43 // pred_region
          %s1685 = sand.u32 %s122, 1
          %s1686 = scalar_lea.sflag [#allocation3], %s1685
          %s1687 = sand.u32 %s122, 1
          %s1688 = smul.addr %s1687, 16
          %s1689 = scalar_lea.vmem [#allocation2], %s1688
          %1690 = dma.done %s1686, 256
        $region48: #{cp_embedding_forward.1} parent=43 // pred_fallthru
          _
        // Predicated region
        $region49: #{cp_embedding_forward.1} parent=43 // pred_check
          %p1691 = pneg %p165
        $region50: #{cp_embedding_forward.1} parent=43 // pred_check_branch
          %1693 = sbr.rel (%p1691) target = $region52
        $region51: #{cp_embedding_forward.1} parent=43 // pred_region
          %s1694 = sand.u32 %s150, 1
          %s1695 = scalar_lea.sflag [#allocation5], %s1694
          %s1696 = sand.u32 %s150, 1
          %s1697 = smul.addr %s1696, 8
          %s1698 = scalar_lea.vmem [#allocation4], %s1697
          %1699 = dma.done %s1695, 128
        $region52: #{cp_embedding_forward.1} parent=43 // pred_fallthru
          _
      $region44: #{cp_embedding_forward.1} parent=5 // pred_fallthru
        _
    $region6: #{cp_embedding_forward.1} parent=1 // loop_footer
      %s21 = sadd.s32 1, %s17
    $region7: #{cp_embedding_forward.1} parent=1 // loop_footer_branch
      %16 = sbr.rel target = $region3
    $region8: #{cp_embedding_forward.1} parent=1 // loop_exit
      _
    %1700 = vsyncpa [#allocation3], 1
    %s1701 = scalar_lea.sflag [#allocation3], 1
    %1702 = vsyncpa %s1701, 1
    %1703 = vsyncpa [#allocation5], 1
    %s1704 = scalar_lea.sflag [#allocation5], 1
    %1705 = vsyncpa %s1704, 1

</llo_original>
